<compile_context>
chip_gen: v7x
topology: tpu7x:2x2x1
jax: 0.10.0
libtpu: 0.0.40
codegen_flags: <defaults>
</compile_context>

<pallas_src>
import math
import numpy as np
import jax
import jax.numpy as jnp
from jax import lax
from jax.experimental import pallas as pl
from jax.experimental.pallas import tpu as pltpu  # noqa: F401  (TPU backend assumed)

G = 2            # graphs per batch
N = 8            # nodes (entities) per graph
DIN = 32         # in_node_feats
FIN = 7          # in_edge_feats (edge_feature_dim = 7 in the module)
FIN_PAD = 8      # zero-padded edge feature dim (clean 8-row weight blocks)
H = 4            # num_heads
DOUT = 16        # out_node_feats
FOUT = 8         # out_edge_feats
HF = H * FOUT            # 32
HD = H * DOUT            # 64
EDGE_W = N * HF          # 256  (lane-dense edge-output slab width)
SLAB_W = DIN + N * FIN_PAD + H * N   # 32 + 64 + 32 = 128 (lane-dense input slab)
OUT_W = EDGE_W + HD      # 320  (edge slab | node slab)
NEG_SLOPE = 0.01         # torch.nn.functional.leaky_relu default


def egat_kernel(slab_ref, dst_ref, wc_ref, bc_ref, wf_ref, wa_ref, out_ref):
    # ---- batched loads (all G graphs stacked on sublanes) ------------------
    h_all = slab_ref[:, 0:DIN]                            # (G*N, DIN)
    f_all = slab_ref[:, DIN:DIN + N * FIN_PAD]            # (G*N, N*FIN_PAD)
    m_all = slab_ref[:, DIN + N * FIN_PAD:SLAB_W]         # (G*N, H*N) adjacency mask

    # fc_nodes + tiled src-part of fc_edges as ONE MXU matmul on the shared LHS.
    comb = jnp.dot(h_all, wc_ref[...],
                   preferred_element_type=jnp.float32) + bc_ref[...]   # (G*N, 320)
    ht_all = comb[:, 0:HD]                                 # fc_nodes(h)      (G*N, 64)
    src_all = comb[:, HD:HD + EDGE_W]                      # src partial      (G*N, 256)

    # edge-feature partial: block-diagonal weight keeps the per-dst structure.
    f_proj = jnp.dot(f_all, wf_ref[...],
                     preferred_element_type=jnp.float32)   # (G*N, 256)

    dst_all = dst_ref[...]                                 # (G, 256) dst partial rows

    for g in range(G):                                     # static loop, G = 2
        r0, r1 = g * N, (g + 1) * N

        # ---- edge path: z = src + edge + dst, leaky_relu --------------------
        dst_b = jnp.broadcast_to(dst_all[g:g + 1, :], (N, EDGE_W))
        z = src_all[r0:r1, :] + f_proj[r0:r1, :] + dst_b
        f_out = jnp.where(z > 0, z, NEG_SLOPE * z)         # (8, 256)
        out_ref[r0:r1, 0:EDGE_W] = f_out                   # lane-dense edge store

        # ---- attention logits: fc_attn(f').sum(-1) via block-diag matmul ----
        a = jnp.dot(f_out, wa_ref[...],
                    preferred_element_type=jnp.float32)    # (8, H*N)

        # ---- masked softmax over incoming edges (src on sublanes) -----------
        m = m_all[r0:r1, :]
        logits = jnp.where(m > 0.0, a, -1e30)
        mx = jnp.max(logits, axis=0, keepdims=True)
        e = jnp.exp(logits - mx) * m
        denom = jnp.maximum(jnp.sum(e, axis=0, keepdims=True), 1e-20)
        alpha = e / denom                                  # exact divide (accuracy fix)

        # ---- per-head aggregation on MXU; write straight into output slab ---
        ht_g = ht_all[r0:r1, :]
        for hd in range(H):
            a_h = alpha[:, hd * N:(hd + 1) * N]            # (8, 8)
            ht_h = ht_g[:, hd * DOUT:(hd + 1) * DOUT]      # (8, 16)
            res = lax.dot_general(a_h, ht_h,
                                  (((0,), (0,)), ((), ())),   # contract over src
                                  preferred_element_type=jnp.float32)  # (8, 16)
            out_ref[r0:r1, EDGE_W + hd * DOUT:EDGE_W + (hd + 1) * DOUT] = res


def pack_egat_params(wn_t, bn, we_t, wa):
    """One-time weight packing (hoisted out of the per-call forward).
    wn_t:(DIN,H*DOUT), bn:(H*DOUT,), we_t:(2*DIN+FIN,H*FOUT) rows [src|edge|dst],
    wa:(H,FOUT)."""
    we_src = we_t[:DIN]                       # (DIN, HF)
    we_f = we_t[DIN:DIN + FIN]                # (FIN, HF)
    we_dst = we_t[DIN + FIN:]                 # (DIN, HF)

    # fc_nodes and the tiled src weight merged into one (DIN, 64+256) matrix.
    we_src_tiled = jnp.tile(we_src, (1, N))                             # (DIN, 256)
    w_comb = jnp.concatenate([wn_t, we_src_tiled], axis=1)              # (DIN, 320)
    b_comb = jnp.concatenate(
        [bn, jnp.zeros((EDGE_W,), jnp.float32)]).reshape(1, HD + EDGE_W)

    # Edge-feature weight: pad FIN->8 and fold per-dst block structure in.
    we_f_pad = jnp.zeros((FIN_PAD, HF), jnp.float32).at[:FIN].set(we_f)
    we_f_big = jnp.kron(jnp.eye(N, dtype=jnp.float32), we_f_pad)        # (64, 256)

    # fc_attn(f').sum(-1) == per-head dot with Wa.sum(0); bake (dst, head) blocks.
    wsum = jnp.sum(wa, axis=0)                                          # (FOUT,)
    attn_head = jnp.kron(jnp.eye(H, dtype=jnp.float32), wsum[:, None])  # (HF, H)
    attn_big = (attn_head[None, :, :, None] *
                jnp.eye(N, dtype=jnp.float32)[:, None, None, :]
                ).reshape(EDGE_W, H * N)                                # (256, 32)

    return {"w_comb": w_comb, "b_comb": b_comb, "we_f_big": we_f_big,
            "attn_big": attn_big, "we_dst": we_dst}


_COST = pl.CostEstimate(
    flops=(2 * G * N * DIN * (HD + EDGE_W)          # merged node+src matmul
           + 2 * G * N * (N * FIN_PAD) * EDGE_W     # edge-feature matmul
           + 2 * G * N * EDGE_W * (H * N)           # attention logits
           + 2 * G * H * N * N * DOUT),             # aggregation
    transcendentals=G * N * H * N,                  # softmax exp
    bytes_accessed=4 * (G * N * SLAB_W + G * EDGE_W
                        + DIN * (HD + EDGE_W) + (HD + EDGE_W)
                        + N * FIN_PAD * EDGE_W + EDGE_W * H * N
                        + G * N * OUT_W))


def egat_forward(h, f_dense, mask, params):
    """h:(G,N,DIN), f_dense:(G,N,N,FIN), mask:(G,N,N) float {0,1}, params from
    pack_egat_params(). Returns (node_out (G,N,H,DOUT), edge_out (G,N,N,H,FOUT))."""
    # Per-call data prep (tiny): pack node feats / edge feats / mask into one
    # lane-dense (G*N, 128) slab; project the dst contribution with the raw
    # (DIN, HF) weight instead of the old 256 KiB block-diagonal matrix.
    f_pad = jnp.zeros((G, N, N, FIN_PAD), jnp.float32).at[..., :FIN].set(f_dense)
    f_in = f_pad.reshape(G, N, N * FIN_PAD)                          # (G, 8, 64)
    mask_hd = jnp.tile(mask, (1, 1, H))                              # (G, 8, 32)
    slab = jnp.concatenate([h, f_in, mask_hd], axis=-1).reshape(G * N, SLAB_W)
    dst_row = jnp.einsum("gnd,dk->gnk", h, params["we_dst"],
                         precision=lax.Precision.HIGHEST).reshape(G, EDGE_W)

    out = pl.pallas_call(
        egat_kernel,
        out_shape=jax.ShapeDtypeStruct((G * N, OUT_W), jnp.float32),
        cost_estimate=_COST,
    )(slab, dst_row, params["w_comb"], params["b_comb"],
      params["we_f_big"], params["attn_big"])

    edge_out = out[:, :EDGE_W].reshape(G, N, N, H, FOUT)
    node_out = out[:, EDGE_W:].reshape(G, N, H, DOUT)
    return node_out, edge_out


egat_forward_jit = jax.jit(egat_forward)


def egat_reference(h, f_dense, mask, wn_t, bn, we_t, wa):
    """Float64 NumPy reference (single graph) mirroring the PyTorch/DGL semantics."""
    h = np.asarray(h, np.float64)
    f_dense = np.asarray(f_dense, np.float64)
    mask = np.asarray(mask, np.float64)
    wn_t = np.asarray(wn_t, np.float64)
    bn = np.asarray(bn, np.float64)
    we_t = np.asarray(we_t, np.float64)
    wa = np.asarray(wa, np.float64)

    ht = (h @ wn_t + bn).reshape(N, H, DOUT)
    h_src = np.broadcast_to(h[:, None, :], (N, N, DIN))
    h_dst = np.broadcast_to(h[None, :, :], (N, N, DIN))
    stack = np.concatenate([h_src, f_dense, h_dst], axis=-1)         # (N, N, 2*DIN+FIN)
    z = stack @ we_t                                                 # (N, N, H*FOUT)
    f_out = np.where(z > 0, z, NEG_SLOPE * z).reshape(N, N, H, FOUT)
    a = (f_out @ wa.T).sum(-1)                                       # (N_src, N_dst, H)
    neg = np.where(mask[:, :, None] > 0, a, -np.inf)
    mx = np.max(neg, axis=0, keepdims=True)
    mx = np.where(np.isfinite(mx), mx, 0.0)                          # fully-masked cols
    e = np.exp(neg - mx) * mask[:, :, None]
    denom = e.sum(axis=0, keepdims=True)
    alpha = e / np.where(denom > 0, denom, 1.0)                      # isolated dst -> 0
    h_out = np.einsum("sdh,shk->dhk", alpha, ht)
    return h_out, f_out


if __name__ == "__main__":
    key = jax.random.PRNGKey(0)
    k_h, k_f, k_wn, k_bn, k_we, k_wa = jax.random.split(key, 6)

    gain = math.sqrt(2.0)  # init.calculate_gain('relu')
    in_edge_total = 2 * DIN + FIN

    # fc_nodes.weight : (H*Dout, Din), xavier_normal -> stored transposed
    std_n = gain * math.sqrt(2.0 / (DIN + H * DOUT))
    wn_t = std_n * jax.random.normal(k_wn, (DIN, H * DOUT), jnp.float32)
    bound = 1.0 / math.sqrt(DIN)  # default nn.Linear bias init (not reset)
    bn = jax.random.uniform(k_bn, (H * DOUT,), jnp.float32, -bound, bound)

    # fc_edges.weight : (H*Fout, 2*Din+Fin), xavier_normal, no bias
    std_e = gain * math.sqrt(2.0 / (in_edge_total + H * FOUT))
    we_t = std_e * jax.random.normal(k_we, (in_edge_total, H * FOUT), jnp.float32)

    # fc_attn.weight : (H, Fout), xavier_normal, no bias
    std_a = gain * math.sqrt(2.0 / (H + FOUT))
    wa = std_a * jax.random.normal(k_wa, (H, FOUT), jnp.float32)

    # synthetic batch of G graphs: node feats, dense 7-dim link feats, adjacency masks.
    h = jax.random.normal(k_h, (G, N, DIN), jnp.float32)
    f_dense = jax.random.uniform(k_f, (G, N, N, FIN), jnp.float32)
    base = 1.0 - jnp.eye(N, dtype=jnp.float32)      # complete graph w/o self loops
    mask0 = base
    mask1 = base.at[:, 0].set(0.0)                  # graph 1: node 0 has no incoming edges
    mask = jnp.stack([mask0, mask1], axis=0)

    params = pack_egat_params(wn_t, bn, we_t, wa)   # one-time packed weights (cached)

    node_out, edge_out = egat_forward_jit(h, f_dense, mask, params)
    node_out = jax.block_until_ready(node_out)
    edge_out = jax.block_until_ready(edge_out)

    assert node_out.shape == (G, N, H, DOUT) and edge_out.shape == (G, N, N, H, FOUT)
    for g in range(G):
        node_ref, edge_ref = egat_reference(h[g], f_dense[g], mask[g], wn_t, bn, we_t, wa)
        np.testing.assert_allclose(np.asarray(node_out[g]), node_ref, rtol=2e-3, atol=2e-3)
        np.testing.assert_allclose(np.asarray(edge_out[g]), edge_ref, rtol=2e-3, atol=2e-3)
    print("KERNEL_OK")
</pallas_src>

<mosaic_0001>
module attributes {stable_mosaic.version = 11 : i64} {
  func.func @egat_kernel(%arg0: memref<16x128xf32, #tpu.memory_space<vmem>>, %arg1: memref<2x256xf32, #tpu.memory_space<vmem>>, %arg2: memref<32x320xf32, #tpu.memory_space<vmem>>, %arg3: memref<1x320xf32, #tpu.memory_space<vmem>>, %arg4: memref<64x256xf32, #tpu.memory_space<vmem>>, %arg5: memref<256x32xf32, #tpu.memory_space<vmem>>, %arg6: memref<16x320xf32, #tpu.memory_space<vmem>>) attributes {dimension_semantics = [], scalar_prefetch = 0 : i64, scratch_operands = 0 : i64, tpu.core_type = #tpu.core_type<tc>} {
    %c0 = arith.constant 0 : index
    %c0_0 = arith.constant 0 : index
    %0 = vector.load %arg0[%c0, %c0_0] : memref<16x128xf32, #tpu.memory_space<vmem>>, vector<16x32xf32>
    %c0_1 = arith.constant 0 : index
    %c32 = arith.constant 32 : index
    %1 = vector.load %arg0[%c0_1, %c32] : memref<16x128xf32, #tpu.memory_space<vmem>>, vector<16x64xf32>
    %c0_2 = arith.constant 0 : index
    %c96 = arith.constant 96 : index
    %2 = vector.load %arg0[%c0_2, %c96] : memref<16x128xf32, #tpu.memory_space<vmem>>, vector<16x32xf32>
    %c0_3 = arith.constant 0 : index
    %c0_4 = arith.constant 0 : index
    %3 = vector.load %arg2[%c0_3, %c0_4] : memref<32x320xf32, #tpu.memory_space<vmem>>, vector<32x320xf32>
    %cst = arith.constant dense<0.000000e+00> : vector<16x320xf32>
    %4 = tpu.matmul %0, %3, %cst {dimension_numbers = #tpu.dot_dimension_numbers<[1], [0], [0], [1], [0, 0, 1, 1], [], []>} : vector<16x32xf32>, vector<32x320xf32>, vector<16x320xf32> -> vector<16x320xf32>
    %c0_5 = arith.constant 0 : index
    %c0_6 = arith.constant 0 : index
    %5 = vector.load %arg3[%c0_5, %c0_6] : memref<1x320xf32, #tpu.memory_space<vmem>>, vector<1x320xf32>
    %6 = vector.broadcast %5 : vector<1x320xf32> to vector<16x320xf32>
    %7 = arith.addf %4, %6 : vector<16x320xf32>
    %8 = vector.extract_strided_slice %7 {offsets = [0, 0], sizes = [16, 64], strides = [1, 1]} : vector<16x320xf32> to vector<16x64xf32>
    %9 = vector.extract_strided_slice %7 {offsets = [0, 64], sizes = [16, 256], strides = [1, 1]} : vector<16x320xf32> to vector<16x256xf32>
    %c0_7 = arith.constant 0 : index
    %c0_8 = arith.constant 0 : index
    %10 = vector.load %arg4[%c0_7, %c0_8] : memref<64x256xf32, #tpu.memory_space<vmem>>, vector<64x256xf32>
    %cst_9 = arith.constant dense<0.000000e+00> : vector<16x256xf32>
    %11 = tpu.matmul %1, %10, %cst_9 {dimension_numbers = #tpu.dot_dimension_numbers<[1], [0], [0], [1], [0, 0, 1, 1], [], []>} : vector<16x64xf32>, vector<64x256xf32>, vector<16x256xf32> -> vector<16x256xf32>
    %c0_10 = arith.constant 0 : index
    %c0_11 = arith.constant 0 : index
    %12 = vector.load %arg1[%c0_10, %c0_11] : memref<2x256xf32, #tpu.memory_space<vmem>>, vector<2x256xf32>
    %13 = vector.extract_strided_slice %12 {offsets = [0, 0], sizes = [1, 256], strides = [1, 1]} : vector<2x256xf32> to vector<1x256xf32>
    %14 = vector.shape_cast %13 : vector<1x256xf32> to vector<1x256xf32>
    %15 = vector.broadcast %14 : vector<1x256xf32> to vector<8x256xf32>
    %16 = vector.extract_strided_slice %9 {offsets = [0, 0], sizes = [8, 256], strides = [1, 1]} : vector<16x256xf32> to vector<8x256xf32>
    %17 = vector.extract_strided_slice %11 {offsets = [0, 0], sizes = [8, 256], strides = [1, 1]} : vector<16x256xf32> to vector<8x256xf32>
    %18 = arith.addf %16, %17 : vector<8x256xf32>
    %19 = arith.addf %18, %15 : vector<8x256xf32>
    %cst_12 = arith.constant 0.000000e+00 : f32
    %20 = vector.broadcast %cst_12 : f32 to vector<8x256xf32>
    %21 = arith.cmpf ogt, %19, %20 : vector<8x256xf32>
    %cst_13 = arith.constant 0.00999999977 : f32
    %22 = vector.broadcast %cst_13 : f32 to vector<8x256xf32>
    %23 = arith.mulf %22, %19 : vector<8x256xf32>
    %24 = arith.select %21, %19, %23 : vector<8x256xi1>, vector<8x256xf32>
    %c0_14 = arith.constant 0 : index
    %c0_15 = arith.constant 0 : index
    %25 = vector.load %arg6[%c0_14, %c0_15] : memref<16x320xf32, #tpu.memory_space<vmem>>, vector<8x256xf32>
    tpu.vector_store %arg6[%c0_14, %c0_15], %24 {strides = array<i32>} : memref<16x320xf32, #tpu.memory_space<vmem>>, vector<8x256xf32>,
    %c0_16 = arith.constant 0 : index
    %c0_17 = arith.constant 0 : index
    %26 = vector.load %arg5[%c0_16, %c0_17] : memref<256x32xf32, #tpu.memory_space<vmem>>, vector<256x32xf32>
    %cst_18 = arith.constant dense<0.000000e+00> : vector<8x32xf32>
    %27 = tpu.matmul %24, %26, %cst_18 {dimension_numbers = #tpu.dot_dimension_numbers<[1], [0], [0], [1], [0, 0, 1, 1], [], []>} : vector<8x256xf32>, vector<256x32xf32>, vector<8x32xf32> -> vector<8x32xf32>
    %28 = vector.extract_strided_slice %2 {offsets = [0, 0], sizes = [8, 32], strides = [1, 1]} : vector<16x32xf32> to vector<8x32xf32>
    %cst_19 = arith.constant 0.000000e+00 : f32
    %29 = vector.broadcast %cst_19 : f32 to vector<8x32xf32>
    %30 = arith.cmpf ogt, %28, %29 : vector<8x32xf32>
    %cst_20 = arith.constant -1.000000e+30 : f32
    %31 = vector.broadcast %cst_20 : f32 to vector<8x32xf32>
    %32 = arith.select %30, %27, %31 : vector<8x32xi1>, vector<8x32xf32>
    %cst_21 = arith.constant dense<0xFF800000> : vector<32xf32>
    %33 = vector.multi_reduction <maximumf>, %32, %cst_21 [0] : vector<8x32xf32> to vector<32xf32>
    %34 = vector.shape_cast %33 : vector<32xf32> to vector<1x32xf32>
    %35 = vector.broadcast %34 : vector<1x32xf32> to vector<8x32xf32>
    %36 = arith.subf %32, %35 : vector<8x32xf32>
    %37 = math.exp %36 : vector<8x32xf32>
    %38 = arith.mulf %37, %28 : vector<8x32xf32>
    %cst_22 = arith.constant dense<0.000000e+00> : vector<32xf32>
    %39 = vector.multi_reduction <add>, %38, %cst_22 [0] : vector<8x32xf32> to vector<32xf32>
    %40 = vector.shape_cast %39 : vector<32xf32> to vector<1x32xf32>
    %cst_23 = arith.constant 9.99999968E-21 : f32
    %41 = vector.broadcast %cst_23 : f32 to vector<1x32xf32>
    %42 = arith.maximumf %40, %41 : vector<1x32xf32>
    %43 = vector.broadcast %42 : vector<1x32xf32> to vector<8x32xf32>
    %44 = arith.divf %38, %43 : vector<8x32xf32>
    %45 = vector.extract_strided_slice %8 {offsets = [0, 0], sizes = [8, 64], strides = [1, 1]} : vector<16x64xf32> to vector<8x64xf32>
    %46 = vector.extract_strided_slice %44 {offsets = [0, 0], sizes = [8, 8], strides = [1, 1]} : vector<8x32xf32> to vector<8x8xf32>
    %47 = vector.extract_strided_slice %45 {offsets = [0, 0], sizes = [8, 16], strides = [1, 1]} : vector<8x64xf32> to vector<8x16xf32>
    %cst_24 = arith.constant dense<0.000000e+00> : vector<8x16xf32>
    %48 = tpu.matmul %46, %47, %cst_24 {dimension_numbers = #tpu.dot_dimension_numbers<[0], [0], [1], [1], [0, 1, 1, 1], [], []>} : vector<8x8xf32>, vector<8x16xf32>, vector<8x16xf32> -> vector<8x16xf32>
    %c0_25 = arith.constant 0 : index
    %c256 = arith.constant 256 : index
    %49 = vector.load %arg6[%c0_25, %c256] : memref<16x320xf32, #tpu.memory_space<vmem>>, vector<8x16xf32>
    tpu.vector_store %arg6[%c0_25, %c256], %48 {strides = array<i32>} : memref<16x320xf32, #tpu.memory_space<vmem>>, vector<8x16xf32>,
    %50 = vector.extract_strided_slice %44 {offsets = [0, 8], sizes = [8, 8], strides = [1, 1]} : vector<8x32xf32> to vector<8x8xf32>
    %51 = vector.extract_strided_slice %45 {offsets = [0, 16], sizes = [8, 16], strides = [1, 1]} : vector<8x64xf32> to vector<8x16xf32>
    %cst_26 = arith.constant dense<0.000000e+00> : vector<8x16xf32>
    %52 = tpu.matmul %50, %51, %cst_26 {dimension_numbers = #tpu.dot_dimension_numbers<[0], [0], [1], [1], [0, 1, 1, 1], [], []>} : vector<8x8xf32>, vector<8x16xf32>, vector<8x16xf32> -> vector<8x16xf32>
    %c0_27 = arith.constant 0 : index
    %c272 = arith.constant 272 : index
    %53 = vector.load %arg6[%c0_27, %c272] : memref<16x320xf32, #tpu.memory_space<vmem>>, vector<8x16xf32>
    tpu.vector_store %arg6[%c0_27, %c272], %52 {strides = array<i32>} : memref<16x320xf32, #tpu.memory_space<vmem>>, vector<8x16xf32>,
    %54 = vector.extract_strided_slice %44 {offsets = [0, 16], sizes = [8, 8], strides = [1, 1]} : vector<8x32xf32> to vector<8x8xf32>
    %55 = vector.extract_strided_slice %45 {offsets = [0, 32], sizes = [8, 16], strides = [1, 1]} : vector<8x64xf32> to vector<8x16xf32>
    %cst_28 = arith.constant dense<0.000000e+00> : vector<8x16xf32>
    %56 = tpu.matmul %54, %55, %cst_28 {dimension_numbers = #tpu.dot_dimension_numbers<[0], [0], [1], [1], [0, 1, 1, 1], [], []>} : vector<8x8xf32>, vector<8x16xf32>, vector<8x16xf32> -> vector<8x16xf32>
    %c0_29 = arith.constant 0 : index
    %c288 = arith.constant 288 : index
    %57 = vector.load %arg6[%c0_29, %c288] : memref<16x320xf32, #tpu.memory_space<vmem>>, vector<8x16xf32>
    tpu.vector_store %arg6[%c0_29, %c288], %56 {strides = array<i32>} : memref<16x320xf32, #tpu.memory_space<vmem>>, vector<8x16xf32>,
    %58 = vector.extract_strided_slice %44 {offsets = [0, 24], sizes = [8, 8], strides = [1, 1]} : vector<8x32xf32> to vector<8x8xf32>
    %59 = vector.extract_strided_slice %45 {offsets = [0, 48], sizes = [8, 16], strides = [1, 1]} : vector<8x64xf32> to vector<8x16xf32>
    %cst_30 = arith.constant dense<0.000000e+00> : vector<8x16xf32>
    %60 = tpu.matmul %58, %59, %cst_30 {dimension_numbers = #tpu.dot_dimension_numbers<[0], [0], [1], [1], [0, 1, 1, 1], [], []>} : vector<8x8xf32>, vector<8x16xf32>, vector<8x16xf32> -> vector<8x16xf32>
    %c0_31 = arith.constant 0 : index
    %c304 = arith.constant 304 : index
    %61 = vector.load %arg6[%c0_31, %c304] : memref<16x320xf32, #tpu.memory_space<vmem>>, vector<8x16xf32>
    tpu.vector_store %arg6[%c0_31, %c304], %60 {strides = array<i32>} : memref<16x320xf32, #tpu.memory_space<vmem>>, vector<8x16xf32>,
    %62 = vector.extract_strided_slice %12 {offsets = [1, 0], sizes = [1, 256], strides = [1, 1]} : vector<2x256xf32> to vector<1x256xf32>
    %63 = vector.shape_cast %62 : vector<1x256xf32> to vector<1x256xf32>
    %64 = vector.broadcast %63 : vector<1x256xf32> to vector<8x256xf32>
    %65 = vector.extract_strided_slice %9 {offsets = [8, 0], sizes = [8, 256], strides = [1, 1]} : vector<16x256xf32> to vector<8x256xf32>
    %66 = vector.extract_strided_slice %11 {offsets = [8, 0], sizes = [8, 256], strides = [1, 1]} : vector<16x256xf32> to vector<8x256xf32>
    %67 = arith.addf %65, %66 : vector<8x256xf32>
    %68 = arith.addf %67, %64 : vector<8x256xf32>
    %cst_32 = arith.constant 0.000000e+00 : f32
    %69 = vector.broadcast %cst_32 : f32 to vector<8x256xf32>
    %70 = arith.cmpf ogt, %68, %69 : vector<8x256xf32>
    %cst_33 = arith.constant 0.00999999977 : f32
    %71 = vector.broadcast %cst_33 : f32 to vector<8x256xf32>
    %72 = arith.mulf %71, %68 : vector<8x256xf32>
    %73 = arith.select %70, %68, %72 : vector<8x256xi1>, vector<8x256xf32>
    %c8 = arith.constant 8 : index
    %c0_34 = arith.constant 0 : index
    %74 = vector.load %arg6[%c8, %c0_34] : memref<16x320xf32, #tpu.memory_space<vmem>>, vector<8x256xf32>
    tpu.vector_store %arg6[%c8, %c0_34], %73 {strides = array<i32>} : memref<16x320xf32, #tpu.memory_space<vmem>>, vector<8x256xf32>,
    %c0_35 = arith.constant 0 : index
    %c0_36 = arith.constant 0 : index
    %75 = vector.load %arg5[%c0_35, %c0_36] : memref<256x32xf32, #tpu.memory_space<vmem>>, vector<256x32xf32>
    %cst_37 = arith.constant dense<0.000000e+00> : vector<8x32xf32>
    %76 = tpu.matmul %73, %75, %cst_37 {dimension_numbers = #tpu.dot_dimension_numbers<[1], [0], [0], [1], [0, 0, 1, 1], [], []>} : vector<8x256xf32>, vector<256x32xf32>, vector<8x32xf32> -> vector<8x32xf32>
    %77 = vector.extract_strided_slice %2 {offsets = [8, 0], sizes = [8, 32], strides = [1, 1]} : vector<16x32xf32> to vector<8x32xf32>
    %cst_38 = arith.constant 0.000000e+00 : f32
    %78 = vector.broadcast %cst_38 : f32 to vector<8x32xf32>
    %79 = arith.cmpf ogt, %77, %78 : vector<8x32xf32>
    %cst_39 = arith.constant -1.000000e+30 : f32
    %80 = vector.broadcast %cst_39 : f32 to vector<8x32xf32>
    %81 = arith.select %79, %76, %80 : vector<8x32xi1>, vector<8x32xf32>
    %cst_40 = arith.constant dense<0xFF800000> : vector<32xf32>
    %82 = vector.multi_reduction <maximumf>, %81, %cst_40 [0] : vector<8x32xf32> to vector<32xf32>
    %83 = vector.shape_cast %82 : vector<32xf32> to vector<1x32xf32>
    %84 = vector.broadcast %83 : vector<1x32xf32> to vector<8x32xf32>
    %85 = arith.subf %81, %84 : vector<8x32xf32>
    %86 = math.exp %85 : vector<8x32xf32>
    %87 = arith.mulf %86, %77 : vector<8x32xf32>
    %cst_41 = arith.constant dense<0.000000e+00> : vector<32xf32>
    %88 = vector.multi_reduction <add>, %87, %cst_41 [0] : vector<8x32xf32> to vector<32xf32>
    %89 = vector.shape_cast %88 : vector<32xf32> to vector<1x32xf32>
    %cst_42 = arith.constant 9.99999968E-21 : f32
    %90 = vector.broadcast %cst_42 : f32 to vector<1x32xf32>
    %91 = arith.maximumf %89, %90 : vector<1x32xf32>
    %92 = vector.broadcast %91 : vector<1x32xf32> to vector<8x32xf32>
    %93 = arith.divf %87, %92 : vector<8x32xf32>
    %94 = vector.extract_strided_slice %8 {offsets = [8, 0], sizes = [8, 64], strides = [1, 1]} : vector<16x64xf32> to vector<8x64xf32>
    %95 = vector.extract_strided_slice %93 {offsets = [0, 0], sizes = [8, 8], strides = [1, 1]} : vector<8x32xf32> to vector<8x8xf32>
    %96 = vector.extract_strided_slice %94 {offsets = [0, 0], sizes = [8, 16], strides = [1, 1]} : vector<8x64xf32> to vector<8x16xf32>
    %cst_43 = arith.constant dense<0.000000e+00> : vector<8x16xf32>
    %97 = tpu.matmul %95, %96, %cst_43 {dimension_numbers = #tpu.dot_dimension_numbers<[0], [0], [1], [1], [0, 1, 1, 1], [], []>} : vector<8x8xf32>, vector<8x16xf32>, vector<8x16xf32> -> vector<8x16xf32>
    %c8_44 = arith.constant 8 : index
    %c256_45 = arith.constant 256 : index
    %98 = vector.load %arg6[%c8_44, %c256_45] : memref<16x320xf32, #tpu.memory_space<vmem>>, vector<8x16xf32>
    tpu.vector_store %arg6[%c8_44, %c256_45], %97 {strides = array<i32>} : memref<16x320xf32, #tpu.memory_space<vmem>>, vector<8x16xf32>,
    %99 = vector.extract_strided_slice %93 {offsets = [0, 8], sizes = [8, 8], strides = [1, 1]} : vector<8x32xf32> to vector<8x8xf32>
    %100 = vector.extract_strided_slice %94 {offsets = [0, 16], sizes = [8, 16], strides = [1, 1]} : vector<8x64xf32> to vector<8x16xf32>
    %cst_46 = arith.constant dense<0.000000e+00> : vector<8x16xf32>
    %101 = tpu.matmul %99, %100, %cst_46 {dimension_numbers = #tpu.dot_dimension_numbers<[0], [0], [1], [1], [0, 1, 1, 1], [], []>} : vector<8x8xf32>, vector<8x16xf32>, vector<8x16xf32> -> vector<8x16xf32>
    %c8_47 = arith.constant 8 : index
    %c272_48 = arith.constant 272 : index
    %102 = vector.load %arg6[%c8_47, %c272_48] : memref<16x320xf32, #tpu.memory_space<vmem>>, vector<8x16xf32>
    tpu.vector_store %arg6[%c8_47, %c272_48], %101 {strides = array<i32>} : memref<16x320xf32, #tpu.memory_space<vmem>>, vector<8x16xf32>,
    %103 = vector.extract_strided_slice %93 {offsets = [0, 16], sizes = [8, 8], strides = [1, 1]} : vector<8x32xf32> to vector<8x8xf32>
    %104 = vector.extract_strided_slice %94 {offsets = [0, 32], sizes = [8, 16], strides = [1, 1]} : vector<8x64xf32> to vector<8x16xf32>
    %cst_49 = arith.constant dense<0.000000e+00> : vector<8x16xf32>
    %105 = tpu.matmul %103, %104, %cst_49 {dimension_numbers = #tpu.dot_dimension_numbers<[0], [0], [1], [1], [0, 1, 1, 1], [], []>} : vector<8x8xf32>, vector<8x16xf32>, vector<8x16xf32> -> vector<8x16xf32>
    %c8_50 = arith.constant 8 : index
    %c288_51 = arith.constant 288 : index
    %106 = vector.load %arg6[%c8_50, %c288_51] : memref<16x320xf32, #tpu.memory_space<vmem>>, vector<8x16xf32>
    tpu.vector_store %arg6[%c8_50, %c288_51], %105 {strides = array<i32>} : memref<16x320xf32, #tpu.memory_space<vmem>>, vector<8x16xf32>,
    %107 = vector.extract_strided_slice %93 {offsets = [0, 24], sizes = [8, 8], strides = [1, 1]} : vector<8x32xf32> to vector<8x8xf32>
    %108 = vector.extract_strided_slice %94 {offsets = [0, 48], sizes = [8, 16], strides = [1, 1]} : vector<8x64xf32> to vector<8x16xf32>
    %cst_52 = arith.constant dense<0.000000e+00> : vector<8x16xf32>
    %109 = tpu.matmul %107, %108, %cst_52 {dimension_numbers = #tpu.dot_dimension_numbers<[0], [0], [1], [1], [0, 1, 1, 1], [], []>} : vector<8x8xf32>, vector<8x16xf32>, vector<8x16xf32> -> vector<8x16xf32>
    %c8_53 = arith.constant 8 : index
    %c304_54 = arith.constant 304 : index
    %110 = vector.load %arg6[%c8_53, %c304_54] : memref<16x320xf32, #tpu.memory_space<vmem>>, vector<8x16xf32>
    tpu.vector_store %arg6[%c8_53, %c304_54], %109 {strides = array<i32>} : memref<16x320xf32, #tpu.memory_space<vmem>>, vector<8x16xf32>,
    return
  }
}

</mosaic_0001>

<llo_original>
// kernel: egat_forward.1
$region0: #{egat_forward.1}
  #allocation0 [shape = 'u32[]', space=smem, size = 0x4, offset = 0x4, fixed_abs, tag = 'smem constant byte address 0x4 - core index']
  #allocation1 [shape = 'u32[144,128]{1,0:T(1,128)}', space=vmem, size = 0x12000, scoped, tag = 'internal scratch']
  %s0 = inlined_call_operand.vmem [shape: f32[16,128], index: 0, kind: input, shape index: {}]
  %s1 = inlined_call_operand.vmem [shape: f32[2,256], index: 1, kind: input, shape index: {}]
  %s2 = inlined_call_operand.vmem [shape: f32[32,320], index: 2, kind: input, shape index: {}]
  %s3 = inlined_call_operand.vmem [shape: f32[1,320], index: 3, kind: input, shape index: {}]
  %s4 = inlined_call_operand.vmem [shape: f32[64,256], index: 4, kind: input, shape index: {}]
  %s5 = inlined_call_operand.vmem [shape: f32[256,32], index: 5, kind: input, shape index: {}]
  %s6 = inlined_call_operand.vmem [shape: f32[16,320], index: 6, kind: output, shape index: {}]
  %s7 = sld [smem:[#allocation0]]
  $region34: #{egat_forward.1} parent=0
    _
  %s9 = ssub.s32 1, %s7
  %s10 = scalar_select 0, %s9, %s7
  // Predicated region
  $region2: #{egat_forward.1} parent=0 // pred_check
    _
  $region3: #{egat_forward.1} parent=0 // pred_check_branch
    %12 = sbr.rel (0) target = $region5
  $region4: #{egat_forward.1} parent=0 // pred_region
    _
  $region5: #{egat_forward.1} parent=0 // pred_fallthru
    _
  // Predicated region
  $region6: #{egat_forward.1} parent=0 // pred_check
    _
  $region7: #{egat_forward.1} parent=0 // pred_check_branch
    %14 = sbr.rel (0) target = $region9
  $region8: #{egat_forward.1} parent=0 // pred_region
    _
  $region9: #{egat_forward.1} parent=0 // pred_fallthru
    _
  // Predicated region
  $region10: #{egat_forward.1} parent=0 // pred_check
    _
  $region11: #{egat_forward.1} parent=0 // pred_check_branch
    %16 = sbr.rel (0) target = $region13
  $region12: #{egat_forward.1} parent=0 // pred_region
    _
  $region13: #{egat_forward.1} parent=0 // pred_fallthru
    _
  // Predicated region
  $region14: #{egat_forward.1} parent=0 // pred_check
    _
  $region15: #{egat_forward.1} parent=0 // pred_check_branch
    %18 = sbr.rel (0) target = $region17
  $region16: #{egat_forward.1} parent=0 // pred_region
    _
  $region17: #{egat_forward.1} parent=0 // pred_fallthru
    _
  // Predicated region
  $region18: #{egat_forward.1} parent=0 // pred_check
    _
  $region19: #{egat_forward.1} parent=0 // pred_check_branch
    %20 = sbr.rel (0) target = $region21
  $region20: #{egat_forward.1} parent=0 // pred_region
    _
  $region21: #{egat_forward.1} parent=0 // pred_fallthru
    _
  // Predicated region
  $region22: #{egat_forward.1} parent=0 // pred_check
    _
  $region23: #{egat_forward.1} parent=0 // pred_check_branch
    %22 = sbr.rel (0) target = $region25
  $region24: #{egat_forward.1} parent=0 // pred_region
    _
  $region25: #{egat_forward.1} parent=0 // pred_fallthru
    _
  %v23 = vld [vmem:[%s0] sm:$0xff]
  %v24 = vld [vmem:[%s0 + $0x8] sm:$0xff]
  %v25 = vld [vmem:[%s2] sm:$0xff]
  %v26 = vld [vmem:[%s2 + $0x8] sm:$0xff]
  %v27 = vld [vmem:[%s2 + $0x10] sm:$0xff]
  %v28 = vld [vmem:[%s2 + $0x18] sm:$0xff]
  %v29 = vld [vmem:[%s2 + $0x20] sm:$0xff]
  %v30 = vld [vmem:[%s2 + $0x28] sm:$0xff]
  %v31 = vld [vmem:[%s2 + $0x30] sm:$0xff]
  %v32 = vld [vmem:[%s2 + $0x38] sm:$0xff]
  %v33 = vld [vmem:[%s2 + $0x40] sm:$0xff]
  %v34 = vld [vmem:[%s2 + $0x48] sm:$0xff]
  %v35 = vld [vmem:[%s2 + $0x50] sm:$0xff]
  %v36 = vld [vmem:[%s2 + $0x58] sm:$0xff]
  %v37 = vld [vmem:[%s3] sm:$0x7]
  %v39 = vlaneseq
  %v40 = vshrl.u32 %v39, 7
  %v41 = vsub.s32 0, %v40
  %v42 = vrot.slane %v37, %v41
  %v43 = vlaneseq
  %v44 = vshrl.u32 %v43, 7
  %v45 = vsub.s32 1, %v44
  %v46 = vrot.slane %v37, %v45
  %v47 = vlaneseq
  %v48 = vshrl.u32 %v47, 7
  %v49 = vsub.s32 2, %v48
  %v50 = vrot.slane %v37, %v49
  %vm54 = vcmask 261120
  %v56 = vsel %vm54, %v23, 0
  %v59 = vsel %vm54, %v24, 0
  %61 = vmatprep.subr.mxu0 %v26
  %62 = vmatpush1.msra.mxu0 %v25
  %63 = vmatprep.subr.mxu0 %v29
  %64 = vmatpush1.msra.mxu0 %v28
  %65 = vmatprep.subr.mxu0 %v32
  %66 = vmatpush1.msra.mxu0 %v31
  %67 = vmatprep.subr.mxu0 %v35
  %68 = vmatpush1.msra.mxu0 %v34
  %69 = vmatprep.subr.mxu0 0.0
  %70 = vmatpush1.msra.mxu0 0.0
  %71 = vmatprep.subr.mxu0 0.0
  %72 = vmatpush1.msra.mxu0 0.0
  %73 = vmatprep.subr.mxu0 0.0
  %74 = vmatpush1.msra.mxu0 0.0
  %75 = vmatprep.subr.mxu0 0.0
  %76 = vmatpush1.msra.mxu0 0.0
  %77 = vmatprep.subr.mxu0 0.0
  %78 = vmatpush1.msra.mxu0 0.0
  %79 = vmatprep.subr.mxu0 0.0
  %80 = vmatpush1.msra.mxu0 0.0
  %81 = vmatprep.subr.mxu0 0.0
  %82 = vmatpush1.msra.mxu0 0.0
  %83 = vmatprep.subr.mxu0 0.0
  %84 = vmatpush1.msra.mxu0 0.0
  %85 = vmatprep.subr.mxu0 0.0
  %86 = vmatpush1.msra.mxu0 0.0
  %87 = vmatprep.subr.mxu0 0.0
  %88 = vmatpush1.msra.mxu0 0.0
  %89 = vmatprep.subr.mxu0 0.0
  %90 = vmatpush1.msra.mxu0 0.0
  %91 = vmatprep.subr.mxu0 0.0
  %92 = vmatpush1.msra.mxu0 0.0
  %93 = vmatprep.subr.mxu0 0.0
  %94 = vmatpush1.msra.mxu0 0.0
  %95 = vmatprep.subr.mxu0 0.0
  %96 = vmatpush1.msra.mxu0 0.0
  %97 = vmatprep.subr.mxu0 0.0
  %98 = vmatpush1.msra.mxu0 0.0
  %99 = vmatprep.subr.mxu0 0.0
  %100 = vmatpush1.msra.mxu0 0.0
  %101 = vmatprep.subr.mxu0 0.0
  %102 = vmatpush1.msra.mxu0 0.0
  %103 = vmatprep.subr.mxu0 0.0
  %104 = vmatpush1.msra.mxu0 0.0
  %105 = vmatprep.subr.mxu0 0.0
  %106 = vmatpush1.msra.mxu0 0.0
  %107 = vmatprep.subr.mxu0 0.0
  %108 = vmatpush1.msra.mxu0 0.0
  %109 = vmatprep.subr.mxu0 0.0
  %110 = vmatpush1.msra.mxu0 0.0
  %111 = vmatprep.subr.mxu0 0.0
  %112 = vmatpush1.msra.mxu0 0.0
  %113 = vmatprep.subr.mxu0 0.0
  %114 = vmatpush1.msra.mxu0 0.0
  %115 = vmatprep.subr.mxu0 0.0
  %116 = vmatpush1.msra.mxu0 0.0
  %117 = vmatprep.subr.mxu0 0.0
  %118 = vmatpush1.msra.mxu0 0.0
  %119 = vmatprep.subr.mxu0 0.0
  %120 = vmatpush1.msra.mxu0 0.0
  %121 = vmatprep.subr.mxu0 0.0
  %122 = vmatpush1.msra.mxu0 0.0
  %123 = vmatprep.subr.mxu0 0.0
  %124 = vmatpush1.msra.mxu0 0.0
  %125 = vmatprep.mubr.f32.mxu0 0.0
  %126 = vmatmul.mubr.f32.gmra.mrb[0].mxu0 %v56
  %v127 = vpop.f32.mrb[0].mxu0
  %v128 = vadd.f32 %v42, %v127
  %v129 = vpop.f32.mrb[0].mxu0
  %v130 = vadd.f32 %v46, %v129
  %131 = vmatprep.mubr.f32.mxu0 0.0
  %132 = vmatmul.mubr.f32.gmra.mrb[0].mxu0 %v59
  %v133 = vpop.f32.mrb[0].mxu0
  %v134 = vadd.f32 %v42, %v133
  %v135 = vpop.f32.mrb[0].mxu0
  %v136 = vadd.f32 %v46, %v135
  %137 = vdwg.mxu0
  %138 = vmatprep.subr.mxu0 0.0
  %139 = vmatpush1.msra.mxu0 %v27
  %140 = vmatprep.subr.mxu0 0.0
  %141 = vmatpush1.msra.mxu0 %v30
  %142 = vmatprep.subr.mxu0 0.0
  %143 = vmatpush1.msra.mxu0 %v33
  %144 = vmatprep.subr.mxu0 0.0
  %145 = vmatpush1.msra.mxu0 %v36
  %146 = vmatprep.subr.mxu0 0.0
  %147 = vmatpush1.msra.mxu0 0.0
  %148 = vmatprep.subr.mxu0 0.0
  %149 = vmatpush1.msra.mxu0 0.0
  %150 = vmatprep.subr.mxu0 0.0
  %151 = vmatpush1.msra.mxu0 0.0
  %152 = vmatprep.subr.mxu0 0.0
  %153 = vmatpush1.msra.mxu0 0.0
  %154 = vmatprep.subr.mxu0 0.0
  %155 = vmatpush1.msra.mxu0 0.0
  %156 = vmatprep.subr.mxu0 0.0
  %157 = vmatpush1.msra.mxu0 0.0
  %158 = vmatprep.subr.mxu0 0.0
  %159 = vmatpush1.msra.mxu0 0.0
  %160 = vmatprep.subr.mxu0 0.0
  %161 = vmatpush1.msra.mxu0 0.0
  %162 = vmatprep.subr.mxu0 0.0
  %163 = vmatpush1.msra.mxu0 0.0
  %164 = vmatprep.subr.mxu0 0.0
  %165 = vmatpush1.msra.mxu0 0.0
  %166 = vmatprep.subr.mxu0 0.0
  %167 = vmatpush1.msra.mxu0 0.0
  %168 = vmatprep.subr.mxu0 0.0
  %169 = vmatpush1.msra.mxu0 0.0
  %170 = vmatprep.subr.mxu0 0.0
  %171 = vmatpush1.msra.mxu0 0.0
  %172 = vmatprep.subr.mxu0 0.0
  %173 = vmatpush1.msra.mxu0 0.0
  %174 = vmatprep.subr.mxu0 0.0
  %175 = vmatpush1.msra.mxu0 0.0
  %176 = vmatprep.subr.mxu0 0.0
  %177 = vmatpush1.msra.mxu0 0.0
  %178 = vmatprep.subr.mxu0 0.0
  %179 = vmatpush1.msra.mxu0 0.0
  %180 = vmatprep.subr.mxu0 0.0
  %181 = vmatpush1.msra.mxu0 0.0
  %182 = vmatprep.subr.mxu0 0.0
  %183 = vmatpush1.msra.mxu0 0.0
  %184 = vmatprep.subr.mxu0 0.0
  %185 = vmatpush1.msra.mxu0 0.0
  %186 = vmatprep.subr.mxu0 0.0
  %187 = vmatpush1.msra.mxu0 0.0
  %188 = vmatprep.subr.mxu0 0.0
  %189 = vmatpush1.msra.mxu0 0.0
  %190 = vmatprep.subr.mxu0 0.0
  %191 = vmatpush1.msra.mxu0 0.0
  %192 = vmatprep.subr.mxu0 0.0
  %193 = vmatpush1.msra.mxu0 0.0
  %194 = vmatprep.subr.mxu0 0.0
  %195 = vmatpush1.msra.mxu0 0.0
  %196 = vmatprep.subr.mxu0 0.0
  %197 = vmatpush1.msra.mxu0 0.0
  %198 = vmatprep.subr.mxu0 0.0
  %199 = vmatpush1.msra.mxu0 0.0
  %200 = vmatprep.subr.mxu0 0.0
  %201 = vmatpush1.msra.mxu0 0.0
  %202 = vmatprep.mubr.f32.mxu0 0.0
  %203 = vmatmul.mubr.f32.gmra.mrb[0].mxu0 %v56
  %v204 = vpop.f32.mrb[0].mxu0
  %v205 = vadd.f32 %v50, %v204
  %v206 = vpop.f32.mrb[0].mxu0
  %207 = vmatprep.mubr.f32.mxu0 0.0
  %208 = vmatmul.mubr.f32.gmra.mrb[0].mxu0 %v59
  %v209 = vpop.f32.mrb[0].mxu0
  %v210 = vadd.f32 %v50, %v209
  %v211 = vpop.f32.mrb[0].mxu0
  %212 = vdwg.mxu0
  %v213 = vld [vmem:[%s4] sm:$0xff]
  %v214 = vld [vmem:[%s4 + $0x8] sm:$0xff]
  %v215 = vld [vmem:[%s4 + $0x10] sm:$0xff]
  %v216 = vld [vmem:[%s4 + $0x18] sm:$0xff]
  %v217 = vld [vmem:[%s4 + $0x20] sm:$0xff]
  %v218 = vld [vmem:[%s4 + $0x28] sm:$0xff]
  %v219 = vld [vmem:[%s4 + $0x30] sm:$0xff]
  %v220 = vld [vmem:[%s4 + $0x38] sm:$0xff]
  %v221 = vld [vmem:[%s4 + $0x40] sm:$0xff]
  %v222 = vld [vmem:[%s4 + $0x48] sm:$0xff]
  %v223 = vld [vmem:[%s4 + $0x50] sm:$0xff]
  %v224 = vld [vmem:[%s4 + $0x58] sm:$0xff]
  %v225 = vld [vmem:[%s4 + $0x60] sm:$0xff]
  %v226 = vld [vmem:[%s4 + $0x68] sm:$0xff]
  %v227 = vld [vmem:[%s4 + $0x70] sm:$0xff]
  %v228 = vld [vmem:[%s4 + $0x78] sm:$0xff]
  %229 = vrot.lane.b32.xlu0 %v23, 96
  %v230 = vpop.permute.xlu0 %229
  %231 = vrot.lane.b32.xlu0 %v24, 96
  %v232 = vpop.permute.xlu0 %231
  %vm233 = vcmask 523264
  %v234 = vsel %vm233, %v230, 0
  %v236 = vsel %vm233, %v232, 0
  %238 = vmatprep.subr.mxu0 %v214
  %239 = vmatpush1.msra.mxu0 %v213
  %240 = vmatprep.subr.mxu0 %v216
  %241 = vmatpush1.msra.mxu0 %v215
  %242 = vmatprep.subr.mxu0 %v218
  %243 = vmatpush1.msra.mxu0 %v217
  %244 = vmatprep.subr.mxu0 %v220
  %245 = vmatpush1.msra.mxu0 %v219
  %246 = vmatprep.subr.mxu0 %v222
  %247 = vmatpush1.msra.mxu0 %v221
  %248 = vmatprep.subr.mxu0 %v224
  %249 = vmatpush1.msra.mxu0 %v223
  %250 = vmatprep.subr.mxu0 %v226
  %251 = vmatpush1.msra.mxu0 %v225
  %252 = vmatprep.subr.mxu0 %v228
  %253 = vmatpush1.msra.mxu0 %v227
  %254 = vmatprep.subr.mxu0 0.0
  %255 = vmatpush1.msra.mxu0 0.0
  %256 = vmatprep.subr.mxu0 0.0
  %257 = vmatpush1.msra.mxu0 0.0
  %258 = vmatprep.subr.mxu0 0.0
  %259 = vmatpush1.msra.mxu0 0.0
  %260 = vmatprep.subr.mxu0 0.0
  %261 = vmatpush1.msra.mxu0 0.0
  %262 = vmatprep.subr.mxu0 0.0
  %263 = vmatpush1.msra.mxu0 0.0
  %264 = vmatprep.subr.mxu0 0.0
  %265 = vmatpush1.msra.mxu0 0.0
  %266 = vmatprep.subr.mxu0 0.0
  %267 = vmatpush1.msra.mxu0 0.0
  %268 = vmatprep.subr.mxu0 0.0
  %269 = vmatpush1.msra.mxu0 0.0
  %270 = vmatprep.subr.mxu0 0.0
  %271 = vmatpush1.msra.mxu0 0.0
  %272 = vmatprep.subr.mxu0 0.0
  %273 = vmatpush1.msra.mxu0 0.0
  %274 = vmatprep.subr.mxu0 0.0
  %275 = vmatpush1.msra.mxu0 0.0
  %276 = vmatprep.subr.mxu0 0.0
  %277 = vmatpush1.msra.mxu0 0.0
  %278 = vmatprep.subr.mxu0 0.0
  %279 = vmatpush1.msra.mxu0 0.0
  %280 = vmatprep.subr.mxu0 0.0
  %281 = vmatpush1.msra.mxu0 0.0
  %282 = vmatprep.subr.mxu0 0.0
  %283 = vmatpush1.msra.mxu0 0.0
  %284 = vmatprep.subr.mxu0 0.0
  %285 = vmatpush1.msra.mxu0 0.0
  %286 = vmatprep.subr.mxu0 0.0
  %287 = vmatpush1.msra.mxu0 0.0
  %288 = vmatprep.subr.mxu0 0.0
  %289 = vmatpush1.msra.mxu0 0.0
  %290 = vmatprep.subr.mxu0 0.0
  %291 = vmatpush1.msra.mxu0 0.0
  %292 = vmatprep.subr.mxu0 0.0
  %293 = vmatpush1.msra.mxu0 0.0
  %294 = vmatprep.subr.mxu0 0.0
  %295 = vmatpush1.msra.mxu0 0.0
  %296 = vmatprep.subr.mxu0 0.0
  %297 = vmatpush1.msra.mxu0 0.0
  %298 = vmatprep.subr.mxu0 0.0
  %299 = vmatpush1.msra.mxu0 0.0
  %300 = vmatprep.subr.mxu0 0.0
  %301 = vmatpush1.msra.mxu0 0.0
  %302 = vmatprep.mubr.f32.mxu0 0.0
  %303 = vmatmul.mubr.f32.gmra.mrb[0].mxu0 %v234
  %v304 = vpop.f32.mrb[0].mxu0
  %v305 = vadd.f32 0.0, %v304
  %v306 = vpop.f32.mrb[0].mxu0
  %v307 = vadd.f32 0.0, %v306
  %308 = vmatprep.mubr.f32.mxu0 0.0
  %309 = vmatmul.mubr.f32.gmra.mrb[0].mxu0 %v236
  %v310 = vpop.f32.mrb[0].mxu0
  %v311 = vadd.f32 0.0, %v310
  %v312 = vpop.f32.mrb[0].mxu0
  %v313 = vadd.f32 0.0, %v312
  %314 = vdwg.mxu0
  %v315 = vld [vmem:[%s1] sm:$0xf]
  %v317 = vlaneseq
  %v318 = vshrl.u32 %v317, 7
  %v319 = vsub.s32 0, %v318
  %v320 = vrot.slane %v315, %v319
  %v321 = vlaneseq
  %v322 = vshrl.u32 %v321, 7
  %v323 = vsub.s32 2, %v322
  %v324 = vrot.slane %v315, %v323
  %v327 = vlaneseq
  %v328 = vshrl.u32 %v327, 7
  %v329 = vsub.s32 0, %v328
  %v330 = vrot.slane %v320, %v329
  %v331 = vlaneseq
  %v332 = vshrl.u32 %v331, 7
  %v333 = vsub.s32 0, %v332
  %v334 = vrot.slane %v324, %v333
  %337 = vrot.lane.b32.xlu0 %v305, 64
  %v338 = vpop.permute.xlu0 %337
  %339 = vrot.lane.b32.xlu0 %v307, 64
  %v340 = vpop.permute.xlu0 %339
  %v341 = vsel %vm233, %v338, %v340
  %v345 = vadd.f32 %v128, %v338
  %v346 = vadd.f32 %v130, %v341
  %v347 = vadd.f32 %v205, %v340
  %350 = vrot.lane.b32.xlu0 %v330, 64
  %v351 = vpop.permute.xlu0 %350
  %352 = vrot.lane.b32.xlu0 %v334, 64
  %v353 = vpop.permute.xlu0 %352
  %v354 = vsel %vm233, %v351, %v353
  %v358 = vadd.f32 %v345, %v351
  %v359 = vadd.f32 %v346, %v354
  %v360 = vadd.f32 %v347, %v353
  %vm361 = vcmp.gt.f32.partialorder %v358, 0.0
  %vm362 = vcmp.gt.f32.partialorder %v359, 0.0
  %vm363 = vcmp.gt.f32.partialorder %v360, 0.0
  %v364 = vmul.f32 %v358, 0.01
  %v365 = vmul.f32 %v359, 0.01
  %v366 = vmul.f32 %v360, 0.01
  %v367 = vsel %vm361, %v358, %v364
  %v368 = vsel %vm362, %v359, %v365
  %v369 = vsel %vm363, %v360, %v366
  %373 = vrot.lane.b32.xlu0 %v367, 64
  %v374 = vpop.permute.xlu0 %373
  %375 = vrot.lane.b32.xlu0 %v368, 64
  %v376 = vpop.permute.xlu0 %375
  %377 = vrot.lane.b32.xlu0 %v369, 64
  %v378 = vpop.permute.xlu0 %377
  %v379 = vsel %vm233, %v374, %v376
  %v380 = vsel %vm233, %v376, %v378
  %383 = vst [vmem:[%s6] sm:$0xff] %v379
  %384 = vst [vmem:[%s6 + $0x8] sm:$0xff] %v380
  %v385 = vld [vmem:[%s5] sm:$0xff]
  %v386 = vld [vmem:[%s5 + $0x8] sm:$0xff]
  %v387 = vld [vmem:[%s5 + $0x10] sm:$0xff]
  %v388 = vld [vmem:[%s5 + $0x18] sm:$0xff]
  %v389 = vld [vmem:[%s5 + $0x20] sm:$0xff]
  %v390 = vld [vmem:[%s5 + $0x28] sm:$0xff]
  %v391 = vld [vmem:[%s5 + $0x30] sm:$0xff]
  %v392 = vld [vmem:[%s5 + $0x38] sm:$0xff]
  %v393 = vld [vmem:[%s5 + $0x40] sm:$0xff]
  %v394 = vld [vmem:[%s5 + $0x48] sm:$0xff]
  %v395 = vld [vmem:[%s5 + $0x50] sm:$0xff]
  %v396 = vld [vmem:[%s5 + $0x58] sm:$0xff]
  %v397 = vld [vmem:[%s5 + $0x60] sm:$0xff]
  %v398 = vld [vmem:[%s5 + $0x68] sm:$0xff]
  %v399 = vld [vmem:[%s5 + $0x70] sm:$0xff]
  %v400 = vld [vmem:[%s5 + $0x78] sm:$0xff]
  %v401 = vld [vmem:[%s5 + $0x80] sm:$0xff]
  %v402 = vld [vmem:[%s5 + $0x88] sm:$0xff]
  %v403 = vld [vmem:[%s5 + $0x90] sm:$0xff]
  %v404 = vld [vmem:[%s5 + $0x98] sm:$0xff]
  %v405 = vld [vmem:[%s5 + $0xa0] sm:$0xff]
  %v406 = vld [vmem:[%s5 + $0xa8] sm:$0xff]
  %v407 = vld [vmem:[%s5 + $0xb0] sm:$0xff]
  %v408 = vld [vmem:[%s5 + $0xb8] sm:$0xff]
  %v409 = vld [vmem:[%s5 + $0xc0] sm:$0xff]
  %v410 = vld [vmem:[%s5 + $0xc8] sm:$0xff]
  %v411 = vld [vmem:[%s5 + $0xd0] sm:$0xff]
  %v412 = vld [vmem:[%s5 + $0xd8] sm:$0xff]
  %v413 = vld [vmem:[%s5 + $0xe0] sm:$0xff]
  %v414 = vld [vmem:[%s5 + $0xe8] sm:$0xff]
  %v415 = vld [vmem:[%s5 + $0xf0] sm:$0xff]
  %v416 = vld [vmem:[%s5 + $0xf8] sm:$0xff]
  %417 = vmatprep.subr.mxu0 0.0
  %418 = vmatpush1.msra.mxu0 %v385
  %419 = vmatprep.subr.mxu0 0.0
  %420 = vmatpush1.msra.mxu0 %v386
  %421 = vmatprep.subr.mxu0 0.0
  %422 = vmatpush1.msra.mxu0 %v387
  %423 = vmatprep.subr.mxu0 0.0
  %424 = vmatpush1.msra.mxu0 %v388
  %425 = vmatprep.subr.mxu0 0.0
  %426 = vmatpush1.msra.mxu0 %v389
  %427 = vmatprep.subr.mxu0 0.0
  %428 = vmatpush1.msra.mxu0 %v390
  %429 = vmatprep.subr.mxu0 0.0
  %430 = vmatpush1.msra.mxu0 %v391
  %431 = vmatprep.subr.mxu0 0.0
  %432 = vmatpush1.msra.mxu0 %v392
  %433 = vmatprep.subr.mxu0 0.0
  %434 = vmatpush1.msra.mxu0 %v393
  %435 = vmatprep.subr.mxu0 0.0
  %436 = vmatpush1.msra.mxu0 %v394
  %437 = vmatprep.subr.mxu0 0.0
  %438 = vmatpush1.msra.mxu0 %v395
  %439 = vmatprep.subr.mxu0 0.0
  %440 = vmatpush1.msra.mxu0 %v396
  %441 = vmatprep.subr.mxu0 0.0
  %442 = vmatpush1.msra.mxu0 %v397
  %443 = vmatprep.subr.mxu0 0.0
  %444 = vmatpush1.msra.mxu0 %v398
  %445 = vmatprep.subr.mxu0 0.0
  %446 = vmatpush1.msra.mxu0 %v399
  %447 = vmatprep.subr.mxu0 0.0
  %448 = vmatpush1.msra.mxu0 %v400
  %449 = vmatprep.subr.mxu0 0.0
  %450 = vmatpush1.msra.mxu0 %v401
  %451 = vmatprep.subr.mxu0 0.0
  %452 = vmatpush1.msra.mxu0 %v402
  %453 = vmatprep.subr.mxu0 0.0
  %454 = vmatpush1.msra.mxu0 %v403
  %455 = vmatprep.subr.mxu0 0.0
  %456 = vmatpush1.msra.mxu0 %v404
  %457 = vmatprep.subr.mxu0 0.0
  %458 = vmatpush1.msra.mxu0 %v405
  %459 = vmatprep.subr.mxu0 0.0
  %460 = vmatpush1.msra.mxu0 %v406
  %461 = vmatprep.subr.mxu0 0.0
  %462 = vmatpush1.msra.mxu0 %v407
  %463 = vmatprep.subr.mxu0 0.0
  %464 = vmatpush1.msra.mxu0 %v408
  %465 = vmatprep.subr.mxu0 0.0
  %466 = vmatpush1.msra.mxu0 %v409
  %467 = vmatprep.subr.mxu0 0.0
  %468 = vmatpush1.msra.mxu0 %v410
  %469 = vmatprep.subr.mxu0 0.0
  %470 = vmatpush1.msra.mxu0 %v411
  %471 = vmatprep.subr.mxu0 0.0
  %472 = vmatpush1.msra.mxu0 %v412
  %473 = vmatprep.subr.mxu0 0.0
  %474 = vmatpush1.msra.mxu0 %v413
  %475 = vmatprep.subr.mxu0 0.0
  %476 = vmatpush1.msra.mxu0 %v414
  %477 = vmatprep.subr.mxu0 0.0
  %478 = vmatpush1.msra.mxu0 %v415
  %479 = vmatprep.subr.mxu0 0.0
  %480 = vmatpush1.msra.mxu0 %v416
  %481 = vmatprep.mubr.f32.mxu0 %v380
  %482 = vmatmul.mubr.f32.gmra.mrb[0].mxu0 %v379
  %v483 = vpop.f32.mrb[0].mxu0
  %v484 = vadd.f32 0.0, %v483
  %v485 = vpop.f32.mrb[0].mxu0
  %486 = vdwg.mxu0
  %vm487 = vcmp.gt.f32.partialorder %v23, 0.0
  %489 = vrot.lane.b32.xlu0 %v484, 96
  %v490 = vpop.permute.xlu0 %489
  %v492 = vsel %vm487, %v490, -1e+30
  %vm493 = vcmask 1048320
  %v494 = vsel %vm493, %v492, -inf
  %v495 = vrot.slane %v494, 4
  %v496 = vmax.f32 %v494, %v495
  %v497 = vrot.slane %v496, 2
  %v498 = vmax.f32 %v496, %v497
  %v499 = vrot.slane %v498, 1
  %v500 = vmax.f32 %v498, %v499
  %v501 = vsub.f32 %v492, %v500
  %v502 = vmul.f32 %v501, 1.442695
  %v503 = vpow.pop %v502
  %v504 = vmul.f32 %v503, %v23
  %v505 = vsel %vm493, %v504, 0.0
  %v506 = vrot.slane %v505, 4
  %v507 = vadd.f32 %v505, %v506
  %v508 = vrot.slane %v507, 2
  %v509 = vadd.f32 %v507, %v508
  %v510 = vrot.slane %v509, 1
  %v511 = vadd.f32 %v509, %v510
  %v512 = vmax.f32 %v511, 1e-20
  %v513 = vrcp.pop %v512
  %v514 = vmul.f32 %v504, %v513
  %516 = vrot.lane.b32.xlu0 %v514, 32
  %v517 = vpop.permute.xlu0 %516
  %519 = vxpose.xlu0.b32.start [1/16] %v517, 128
  %520 = vxpose.xlu0.b32.cont [2/16] 0.0, 128
  %521 = vxpose.xlu0.b32.cont [3/16] 0.0, 128
  %522 = vxpose.xlu0.b32.cont [4/16] 0.0, 128
  %523 = vxpose.xlu0.b32.cont [5/16] 0.0, 128
  %524 = vxpose.xlu0.b32.cont [6/16] 0.0, 128
  %525 = vxpose.xlu0.b32.cont [7/16] 0.0, 128
  %526 = vxpose.xlu0.b32.cont [8/16] 0.0, 128
  %527 = vxpose.xlu0.b32.cont [9/16] 0.0, 128
  %528 = vxpose.xlu0.b32.cont [10/16] 0.0, 128
  %529 = vxpose.xlu0.b32.cont [11/16] 0.0, 128
  %530 = vxpose.xlu0.b32.cont [12/16] 0.0, 128
  %531 = vxpose.xlu0.b32.cont [13/16] 0.0, 128
  %532 = vxpose.xlu0.b32.cont [14/16] 0.0, 128
  %533 = vxpose.xlu0.b32.cont [15/16] 0.0, 128
  %534 = vxpose.xlu0.b32.end [16/16] 0.0, 128
  %v535 = vpop.trf.xlu0
  %v536 = vpop.trf.xlu0
  %v537 = vpop.trf.xlu0
  %v538 = vpop.trf.xlu0
  %v539 = vpop.trf.xlu0
  %v540 = vpop.trf.xlu0
  %v541 = vpop.trf.xlu0
  %v542 = vpop.trf.xlu0
  %v543 = vpop.trf.xlu0
  %v544 = vpop.trf.xlu0
  %v545 = vpop.trf.xlu0
  %v546 = vpop.trf.xlu0
  %v547 = vpop.trf.xlu0
  %v548 = vpop.trf.xlu0
  %v549 = vpop.trf.xlu0
  %v550 = vpop.trf.xlu0
  %vm551 = vcmask 64512
  %v553 = vsel %vm551, %v535, 0
  %555 = vmatprep.subr.mxu0 0.0
  %556 = vmatpush1.msra.mxu0 %v128
  %557 = vmatprep.subr.mxu0 0.0
  %558 = vmatpush1.msra.mxu0 0.0
  %559 = vmatprep.subr.mxu0 0.0
  %560 = vmatpush1.msra.mxu0 0.0
  %561 = vmatprep.subr.mxu0 0.0
  %562 = vmatpush1.msra.mxu0 0.0
  %563 = vmatprep.subr.mxu0 0.0
  %564 = vmatpush1.msra.mxu0 0.0
  %565 = vmatprep.subr.mxu0 0.0
  %566 = vmatpush1.msra.mxu0 0.0
  %567 = vmatprep.subr.mxu0 0.0
  %568 = vmatpush1.msra.mxu0 0.0
  %569 = vmatprep.subr.mxu0 0.0
  %570 = vmatpush1.msra.mxu0 0.0
  %571 = vmatprep.subr.mxu0 0.0
  %572 = vmatpush1.msra.mxu0 0.0
  %573 = vmatprep.subr.mxu0 0.0
  %574 = vmatpush1.msra.mxu0 0.0
  %575 = vmatprep.subr.mxu0 0.0
  %576 = vmatpush1.msra.mxu0 0.0
  %577 = vmatprep.subr.mxu0 0.0
  %578 = vmatpush1.msra.mxu0 0.0
  %579 = vmatprep.subr.mxu0 0.0
  %580 = vmatpush1.msra.mxu0 0.0
  %581 = vmatprep.subr.mxu0 0.0
  %582 = vmatpush1.msra.mxu0 0.0
  %583 = vmatprep.subr.mxu0 0.0
  %584 = vmatpush1.msra.mxu0 0.0
  %585 = vmatprep.subr.mxu0 0.0
  %586 = vmatpush1.msra.mxu0 0.0
  %587 = vmatprep.subr.mxu0 0.0
  %588 = vmatpush1.msra.mxu0 0.0
  %589 = vmatprep.subr.mxu0 0.0
  %590 = vmatpush1.msra.mxu0 0.0
  %591 = vmatprep.subr.mxu0 0.0
  %592 = vmatpush1.msra.mxu0 0.0
  %593 = vmatprep.subr.mxu0 0.0
  %594 = vmatpush1.msra.mxu0 0.0
  %595 = vmatprep.subr.mxu0 0.0
  %596 = vmatpush1.msra.mxu0 0.0
  %597 = vmatprep.subr.mxu0 0.0
  %598 = vmatpush1.msra.mxu0 0.0
  %599 = vmatprep.subr.mxu0 0.0
  %600 = vmatpush1.msra.mxu0 0.0
  %601 = vmatprep.subr.mxu0 0.0
  %602 = vmatpush1.msra.mxu0 0.0
  %603 = vmatprep.subr.mxu0 0.0
  %604 = vmatpush1.msra.mxu0 0.0
  %605 = vmatprep.subr.mxu0 0.0
  %606 = vmatpush1.msra.mxu0 0.0
  %607 = vmatprep.subr.mxu0 0.0
  %608 = vmatpush1.msra.mxu0 0.0
  %609 = vmatprep.subr.mxu0 0.0
  %610 = vmatpush1.msra.mxu0 0.0
  %611 = vmatprep.subr.mxu0 0.0
  %612 = vmatpush1.msra.mxu0 0.0
  %613 = vmatprep.subr.mxu0 0.0
  %614 = vmatpush1.msra.mxu0 0.0
  %615 = vmatprep.subr.mxu0 0.0
  %616 = vmatpush1.msra.mxu0 0.0
  %617 = vmatprep.subr.mxu0 0.0
  %618 = vmatpush1.msra.mxu0 0.0
  %619 = vmatprep.mubr.f32.mxu0 0.0
  %620 = vmatmul.mubr.f32.gmra.mrb[0].mxu0 %v553
  %v621 = vpop.f32.mrb[0].mxu0
  %v622 = vadd.f32 0.0, %v621
  %v623 = vpop.f32.mrb[0].mxu0
  %624 = vdwg.mxu0
  %vm625 = vcmask 130048
  %626 = vst.msk [vmem:[%s6 + $0x10] sm:$0xff] %vm625, %v622
  %627 = vrot.lane.b32.xlu0 %v514, 24
  %v628 = vpop.permute.xlu0 %627
  %630 = vxpose.xlu0.b32.start [1/16] %v628, 128
  %631 = vxpose.xlu0.b32.cont [2/16] 0.0, 128
  %632 = vxpose.xlu0.b32.cont [3/16] 0.0, 128
  %633 = vxpose.xlu0.b32.cont [4/16] 0.0, 128
  %634 = vxpose.xlu0.b32.cont [5/16] 0.0, 128
  %635 = vxpose.xlu0.b32.cont [6/16] 0.0, 128
  %636 = vxpose.xlu0.b32.cont [7/16] 0.0, 128
  %637 = vxpose.xlu0.b32.cont [8/16] 0.0, 128
  %638 = vxpose.xlu0.b32.cont [9/16] 0.0, 128
  %639 = vxpose.xlu0.b32.cont [10/16] 0.0, 128
  %640 = vxpose.xlu0.b32.cont [11/16] 0.0, 128
  %641 = vxpose.xlu0.b32.cont [12/16] 0.0, 128
  %642 = vxpose.xlu0.b32.cont [13/16] 0.0, 128
  %643 = vxpose.xlu0.b32.cont [14/16] 0.0, 128
  %644 = vxpose.xlu0.b32.cont [15/16] 0.0, 128
  %645 = vxpose.xlu0.b32.end [16/16] 0.0, 128
  %v646 = vpop.trf.xlu0
  %v647 = vpop.trf.xlu0
  %v648 = vpop.trf.xlu0
  %v649 = vpop.trf.xlu0
  %v650 = vpop.trf.xlu0
  %v651 = vpop.trf.xlu0
  %v652 = vpop.trf.xlu0
  %v653 = vpop.trf.xlu0
  %v654 = vpop.trf.xlu0
  %v655 = vpop.trf.xlu0
  %v656 = vpop.trf.xlu0
  %v657 = vpop.trf.xlu0
  %v658 = vpop.trf.xlu0
  %v659 = vpop.trf.xlu0
  %v660 = vpop.trf.xlu0
  %v661 = vpop.trf.xlu0
  %663 = vrot.lane.b32.xlu0 %v128, 112
  %v664 = vpop.permute.xlu0 %663
  %v667 = vsel %vm551, %v646, 0
  %669 = vmatprep.subr.mxu0 0.0
  %670 = vmatpush1.msra.mxu0 %v664
  %671 = vmatprep.subr.mxu0 0.0
  %672 = vmatpush1.msra.mxu0 0.0
  %673 = vmatprep.subr.mxu0 0.0
  %674 = vmatpush1.msra.mxu0 0.0
  %675 = vmatprep.subr.mxu0 0.0
  %676 = vmatpush1.msra.mxu0 0.0
  %677 = vmatprep.subr.mxu0 0.0
  %678 = vmatpush1.msra.mxu0 0.0
  %679 = vmatprep.subr.mxu0 0.0
  %680 = vmatpush1.msra.mxu0 0.0
  %681 = vmatprep.subr.mxu0 0.0
  %682 = vmatpush1.msra.mxu0 0.0
  %683 = vmatprep.subr.mxu0 0.0
  %684 = vmatpush1.msra.mxu0 0.0
  %685 = vmatprep.subr.mxu0 0.0
  %686 = vmatpush1.msra.mxu0 0.0
  %687 = vmatprep.subr.mxu0 0.0
  %688 = vmatpush1.msra.mxu0 0.0
  %689 = vmatprep.subr.mxu0 0.0
  %690 = vmatpush1.msra.mxu0 0.0
  %691 = vmatprep.subr.mxu0 0.0
  %692 = vmatpush1.msra.mxu0 0.0
  %693 = vmatprep.subr.mxu0 0.0
  %694 = vmatpush1.msra.mxu0 0.0
  %695 = vmatprep.subr.mxu0 0.0
  %696 = vmatpush1.msra.mxu0 0.0
  %697 = vmatprep.subr.mxu0 0.0
  %698 = vmatpush1.msra.mxu0 0.0
  %699 = vmatprep.subr.mxu0 0.0
  %700 = vmatpush1.msra.mxu0 0.0
  %701 = vmatprep.subr.mxu0 0.0
  %702 = vmatpush1.msra.mxu0 0.0
  %703 = vmatprep.subr.mxu0 0.0
  %704 = vmatpush1.msra.mxu0 0.0
  %705 = vmatprep.subr.mxu0 0.0
  %706 = vmatpush1.msra.mxu0 0.0
  %707 = vmatprep.subr.mxu0 0.0
  %708 = vmatpush1.msra.mxu0 0.0
  %709 = vmatprep.subr.mxu0 0.0
  %710 = vmatpush1.msra.mxu0 0.0
  %711 = vmatprep.subr.mxu0 0.0
  %712 = vmatpush1.msra.mxu0 0.0
  %713 = vmatprep.subr.mxu0 0.0
  %714 = vmatpush1.msra.mxu0 0.0
  %715 = vmatprep.subr.mxu0 0.0
  %716 = vmatpush1.msra.mxu0 0.0
  %717 = vmatprep.subr.mxu0 0.0
  %718 = vmatpush1.msra.mxu0 0.0
  %719 = vmatprep.subr.mxu0 0.0
  %720 = vmatpush1.msra.mxu0 0.0
  %721 = vmatprep.subr.mxu0 0.0
  %722 = vmatpush1.msra.mxu0 0.0
  %723 = vmatprep.subr.mxu0 0.0
  %724 = vmatpush1.msra.mxu0 0.0
  %725 = vmatprep.subr.mxu0 0.0
  %726 = vmatpush1.msra.mxu0 0.0
  %727 = vmatprep.subr.mxu0 0.0
  %728 = vmatpush1.msra.mxu0 0.0
  %729 = vmatprep.subr.mxu0 0.0
  %730 = vmatpush1.msra.mxu0 0.0
  %731 = vmatprep.subr.mxu0 0.0
  %732 = vmatpush1.msra.mxu0 0.0
  %733 = vmatprep.mubr.f32.mxu0 0.0
  %734 = vmatmul.mubr.f32.gmra.mrb[0].mxu0 %v667
  %v735 = vpop.f32.mrb[0].mxu0
  %v736 = vadd.f32 0.0, %v735
  %v737 = vpop.f32.mrb[0].mxu0
  %738 = vdwg.mxu0
  %740 = vrot.lane.b32.xlu0 %v736, 16
  %v741 = vpop.permute.xlu0 %740
  %vm743 = vcmask 261248
  %744 = vst.msk [vmem:[%s6 + $0x10] sm:$0xff] %vm743, %v741
  %745 = vrot.lane.b32.xlu0 %v514, 16
  %v746 = vpop.permute.xlu0 %745
  %748 = vxpose.xlu0.b32.start [1/16] %v746, 128
  %749 = vxpose.xlu0.b32.cont [2/16] 0.0, 128
  %750 = vxpose.xlu0.b32.cont [3/16] 0.0, 128
  %751 = vxpose.xlu0.b32.cont [4/16] 0.0, 128
  %752 = vxpose.xlu0.b32.cont [5/16] 0.0, 128
  %753 = vxpose.xlu0.b32.cont [6/16] 0.0, 128
  %754 = vxpose.xlu0.b32.cont [7/16] 0.0, 128
  %755 = vxpose.xlu0.b32.cont [8/16] 0.0, 128
  %756 = vxpose.xlu0.b32.cont [9/16] 0.0, 128
  %757 = vxpose.xlu0.b32.cont [10/16] 0.0, 128
  %758 = vxpose.xlu0.b32.cont [11/16] 0.0, 128
  %759 = vxpose.xlu0.b32.cont [12/16] 0.0, 128
  %760 = vxpose.xlu0.b32.cont [13/16] 0.0, 128
  %761 = vxpose.xlu0.b32.cont [14/16] 0.0, 128
  %762 = vxpose.xlu0.b32.cont [15/16] 0.0, 128
  %763 = vxpose.xlu0.b32.end [16/16] 0.0, 128
  %v764 = vpop.trf.xlu0
  %v765 = vpop.trf.xlu0
  %v766 = vpop.trf.xlu0
  %v767 = vpop.trf.xlu0
  %v768 = vpop.trf.xlu0
  %v769 = vpop.trf.xlu0
  %v770 = vpop.trf.xlu0
  %v771 = vpop.trf.xlu0
  %v772 = vpop.trf.xlu0
  %v773 = vpop.trf.xlu0
  %v774 = vpop.trf.xlu0
  %v775 = vpop.trf.xlu0
  %v776 = vpop.trf.xlu0
  %v777 = vpop.trf.xlu0
  %v778 = vpop.trf.xlu0
  %v779 = vpop.trf.xlu0
  %780 = vrot.lane.b32.xlu0 %v128, 96
  %v781 = vpop.permute.xlu0 %780
  %v784 = vsel %vm551, %v764, 0
  %786 = vmatprep.subr.mxu0 0.0
  %787 = vmatpush1.msra.mxu0 %v781
  %788 = vmatprep.subr.mxu0 0.0
  %789 = vmatpush1.msra.mxu0 0.0
  %790 = vmatprep.subr.mxu0 0.0
  %791 = vmatpush1.msra.mxu0 0.0
  %792 = vmatprep.subr.mxu0 0.0
  %793 = vmatpush1.msra.mxu0 0.0
  %794 = vmatprep.subr.mxu0 0.0
  %795 = vmatpush1.msra.mxu0 0.0
  %796 = vmatprep.subr.mxu0 0.0
  %797 = vmatpush1.msra.mxu0 0.0
  %798 = vmatprep.subr.mxu0 0.0
  %799 = vmatpush1.msra.mxu0 0.0
  %800 = vmatprep.subr.mxu0 0.0
  %801 = vmatpush1.msra.mxu0 0.0
  %802 = vmatprep.subr.mxu0 0.0
  %803 = vmatpush1.msra.mxu0 0.0
  %804 = vmatprep.subr.mxu0 0.0
  %805 = vmatpush1.msra.mxu0 0.0
  %806 = vmatprep.subr.mxu0 0.0
  %807 = vmatpush1.msra.mxu0 0.0
  %808 = vmatprep.subr.mxu0 0.0
  %809 = vmatpush1.msra.mxu0 0.0
  %810 = vmatprep.subr.mxu0 0.0
  %811 = vmatpush1.msra.mxu0 0.0
  %812 = vmatprep.subr.mxu0 0.0
  %813 = vmatpush1.msra.mxu0 0.0
  %814 = vmatprep.subr.mxu0 0.0
  %815 = vmatpush1.msra.mxu0 0.0
  %816 = vmatprep.subr.mxu0 0.0
  %817 = vmatpush1.msra.mxu0 0.0
  %818 = vmatprep.subr.mxu0 0.0
  %819 = vmatpush1.msra.mxu0 0.0
  %820 = vmatprep.subr.mxu0 0.0
  %821 = vmatpush1.msra.mxu0 0.0
  %822 = vmatprep.subr.mxu0 0.0
  %823 = vmatpush1.msra.mxu0 0.0
  %824 = vmatprep.subr.mxu0 0.0
  %825 = vmatpush1.msra.mxu0 0.0
  %826 = vmatprep.subr.mxu0 0.0
  %827 = vmatpush1.msra.mxu0 0.0
  %828 = vmatprep.subr.mxu0 0.0
  %829 = vmatpush1.msra.mxu0 0.0
  %830 = vmatprep.subr.mxu0 0.0
  %831 = vmatpush1.msra.mxu0 0.0
  %832 = vmatprep.subr.mxu0 0.0
  %833 = vmatpush1.msra.mxu0 0.0
  %834 = vmatprep.subr.mxu0 0.0
  %835 = vmatpush1.msra.mxu0 0.0
  %836 = vmatprep.subr.mxu0 0.0
  %837 = vmatpush1.msra.mxu0 0.0
  %838 = vmatprep.subr.mxu0 0.0
  %839 = vmatpush1.msra.mxu0 0.0
  %840 = vmatprep.subr.mxu0 0.0
  %841 = vmatpush1.msra.mxu0 0.0
  %842 = vmatprep.subr.mxu0 0.0
  %843 = vmatpush1.msra.mxu0 0.0
  %844 = vmatprep.subr.mxu0 0.0
  %845 = vmatpush1.msra.mxu0 0.0
  %846 = vmatprep.subr.mxu0 0.0
  %847 = vmatpush1.msra.mxu0 0.0
  %848 = vmatprep.subr.mxu0 0.0
  %849 = vmatpush1.msra.mxu0 0.0
  %850 = vmatprep.mubr.f32.mxu0 0.0
  %851 = vmatmul.mubr.f32.gmra.mrb[0].mxu0 %v784
  %v852 = vpop.f32.mrb[0].mxu0
  %v853 = vadd.f32 0.0, %v852
  %v854 = vpop.f32.mrb[0].mxu0
  %855 = vdwg.mxu0
  %857 = vrot.lane.b32.xlu0 %v853, 32
  %v858 = vpop.permute.xlu0 %857
  %vm860 = vcmask 392448
  %861 = vst.msk [vmem:[%s6 + $0x10] sm:$0xff] %vm860, %v858
  %862 = vrot.lane.b32.xlu0 %v514, 8
  %v863 = vpop.permute.xlu0 %862
  %865 = vxpose.xlu0.b32.start [1/16] %v863, 128
  %866 = vxpose.xlu0.b32.cont [2/16] 0.0, 128
  %867 = vxpose.xlu0.b32.cont [3/16] 0.0, 128
  %868 = vxpose.xlu0.b32.cont [4/16] 0.0, 128
  %869 = vxpose.xlu0.b32.cont [5/16] 0.0, 128
  %870 = vxpose.xlu0.b32.cont [6/16] 0.0, 128
  %871 = vxpose.xlu0.b32.cont [7/16] 0.0, 128
  %872 = vxpose.xlu0.b32.cont [8/16] 0.0, 128
  %873 = vxpose.xlu0.b32.cont [9/16] 0.0, 128
  %874 = vxpose.xlu0.b32.cont [10/16] 0.0, 128
  %875 = vxpose.xlu0.b32.cont [11/16] 0.0, 128
  %876 = vxpose.xlu0.b32.cont [12/16] 0.0, 128
  %877 = vxpose.xlu0.b32.cont [13/16] 0.0, 128
  %878 = vxpose.xlu0.b32.cont [14/16] 0.0, 128
  %879 = vxpose.xlu0.b32.cont [15/16] 0.0, 128
  %880 = vxpose.xlu0.b32.end [16/16] 0.0, 128
  %v881 = vpop.trf.xlu0
  %v882 = vpop.trf.xlu0
  %v883 = vpop.trf.xlu0
  %v884 = vpop.trf.xlu0
  %v885 = vpop.trf.xlu0
  %v886 = vpop.trf.xlu0
  %v887 = vpop.trf.xlu0
  %v888 = vpop.trf.xlu0
  %v889 = vpop.trf.xlu0
  %v890 = vpop.trf.xlu0
  %v891 = vpop.trf.xlu0
  %v892 = vpop.trf.xlu0
  %v893 = vpop.trf.xlu0
  %v894 = vpop.trf.xlu0
  %v895 = vpop.trf.xlu0
  %v896 = vpop.trf.xlu0
  %897 = vrot.lane.b32.xlu0 %v128, 80
  %v898 = vpop.permute.xlu0 %897
  %v901 = vsel %vm551, %v881, 0
  %903 = vmatprep.subr.mxu0 0.0
  %904 = vmatpush1.msra.mxu0 %v898
  %905 = vmatprep.subr.mxu0 0.0
  %906 = vmatpush1.msra.mxu0 0.0
  %907 = vmatprep.subr.mxu0 0.0
  %908 = vmatpush1.msra.mxu0 0.0
  %909 = vmatprep.subr.mxu0 0.0
  %910 = vmatpush1.msra.mxu0 0.0
  %911 = vmatprep.subr.mxu0 0.0
  %912 = vmatpush1.msra.mxu0 0.0
  %913 = vmatprep.subr.mxu0 0.0
  %914 = vmatpush1.msra.mxu0 0.0
  %915 = vmatprep.subr.mxu0 0.0
  %916 = vmatpush1.msra.mxu0 0.0
  %917 = vmatprep.subr.mxu0 0.0
  %918 = vmatpush1.msra.mxu0 0.0
  %919 = vmatprep.subr.mxu0 0.0
  %920 = vmatpush1.msra.mxu0 0.0
  %921 = vmatprep.subr.mxu0 0.0
  %922 = vmatpush1.msra.mxu0 0.0
  %923 = vmatprep.subr.mxu0 0.0
  %924 = vmatpush1.msra.mxu0 0.0
  %925 = vmatprep.subr.mxu0 0.0
  %926 = vmatpush1.msra.mxu0 0.0
  %927 = vmatprep.subr.mxu0 0.0
  %928 = vmatpush1.msra.mxu0 0.0
  %929 = vmatprep.subr.mxu0 0.0
  %930 = vmatpush1.msra.mxu0 0.0
  %931 = vmatprep.subr.mxu0 0.0
  %932 = vmatpush1.msra.mxu0 0.0
  %933 = vmatprep.subr.mxu0 0.0
  %934 = vmatpush1.msra.mxu0 0.0
  %935 = vmatprep.subr.mxu0 0.0
  %936 = vmatpush1.msra.mxu0 0.0
  %937 = vmatprep.subr.mxu0 0.0
  %938 = vmatpush1.msra.mxu0 0.0
  %939 = vmatprep.subr.mxu0 0.0
  %940 = vmatpush1.msra.mxu0 0.0
  %941 = vmatprep.subr.mxu0 0.0
  %942 = vmatpush1.msra.mxu0 0.0
  %943 = vmatprep.subr.mxu0 0.0
  %944 = vmatpush1.msra.mxu0 0.0
  %945 = vmatprep.subr.mxu0 0.0
  %946 = vmatpush1.msra.mxu0 0.0
  %947 = vmatprep.subr.mxu0 0.0
  %948 = vmatpush1.msra.mxu0 0.0
  %949 = vmatprep.subr.mxu0 0.0
  %950 = vmatpush1.msra.mxu0 0.0
  %951 = vmatprep.subr.mxu0 0.0
  %952 = vmatpush1.msra.mxu0 0.0
  %953 = vmatprep.subr.mxu0 0.0
  %954 = vmatpush1.msra.mxu0 0.0
  %955 = vmatprep.subr.mxu0 0.0
  %956 = vmatpush1.msra.mxu0 0.0
  %957 = vmatprep.subr.mxu0 0.0
  %958 = vmatpush1.msra.mxu0 0.0
  %959 = vmatprep.subr.mxu0 0.0
  %960 = vmatpush1.msra.mxu0 0.0
  %961 = vmatprep.subr.mxu0 0.0
  %962 = vmatpush1.msra.mxu0 0.0
  %963 = vmatprep.subr.mxu0 0.0
  %964 = vmatpush1.msra.mxu0 0.0
  %965 = vmatprep.subr.mxu0 0.0
  %966 = vmatpush1.msra.mxu0 0.0
  %967 = vmatprep.mubr.f32.mxu0 0.0
  %968 = vmatmul.mubr.f32.gmra.mrb[0].mxu0 %v901
  %v969 = vpop.f32.mrb[0].mxu0
  %v970 = vadd.f32 0.0, %v969
  %v971 = vpop.f32.mrb[0].mxu0
  %972 = vdwg.mxu0
  %974 = vrot.lane.b32.xlu0 %v970, 48
  %v975 = vpop.permute.xlu0 %974
  %vm977 = vcmask 523648
  %978 = vst.msk [vmem:[%s6 + $0x10] sm:$0xff] %vm977, %v975
  %v979 = vlaneseq
  %v980 = vshrl.u32 %v979, 7
  %v981 = vsub.s32 1, %v980
  %v982 = vrot.slane %v315, %v981
  %v983 = vlaneseq
  %v984 = vshrl.u32 %v983, 7
  %v985 = vsub.s32 3, %v984
  %v986 = vrot.slane %v315, %v985
  %v989 = vlaneseq
  %v990 = vshrl.u32 %v989, 7
  %v991 = vsub.s32 1, %v990
  %v992 = vrot.slane %v982, %v991
  %v993 = vlaneseq
  %v994 = vshrl.u32 %v993, 7
  %v995 = vsub.s32 1, %v994
  %v996 = vrot.slane %v986, %v995
  %999 = vrot.lane.b32.xlu0 %v311, 64
  %v1000 = vpop.permute.xlu0 %999
  %1001 = vrot.lane.b32.xlu0 %v313, 64
  %v1002 = vpop.permute.xlu0 %1001
  %v1003 = vsel %vm233, %v1000, %v1002
  %v1007 = vadd.f32 %v134, %v1000
  %v1008 = vadd.f32 %v136, %v1003
  %v1009 = vadd.f32 %v210, %v1002
  %1012 = vrot.lane.b32.xlu0 %v992, 64
  %v1013 = vpop.permute.xlu0 %1012
  %1014 = vrot.lane.b32.xlu0 %v996, 64
  %v1015 = vpop.permute.xlu0 %1014
  %v1016 = vsel %vm233, %v1013, %v1015
  %v1020 = vadd.f32 %v1007, %v1013
  %v1021 = vadd.f32 %v1008, %v1016
  %v1022 = vadd.f32 %v1009, %v1015
  %vm1023 = vcmp.gt.f32.partialorder %v1020, 0.0
  %vm1024 = vcmp.gt.f32.partialorder %v1021, 0.0
  %vm1025 = vcmp.gt.f32.partialorder %v1022, 0.0
  %v1026 = vmul.f32 %v1020, 0.01
  %v1027 = vmul.f32 %v1021, 0.01
  %v1028 = vmul.f32 %v1022, 0.01
  %v1029 = vsel %vm1023, %v1020, %v1026
  %v1030 = vsel %vm1024, %v1021, %v1027
  %v1031 = vsel %vm1025, %v1022, %v1028
  %1035 = vrot.lane.b32.xlu0 %v1029, 64
  %v1036 = vpop.permute.xlu0 %1035
  %1037 = vrot.lane.b32.xlu0 %v1030, 64
  %v1038 = vpop.permute.xlu0 %1037
  %1039 = vrot.lane.b32.xlu0 %v1031, 64
  %v1040 = vpop.permute.xlu0 %1039
  %v1041 = vsel %vm233, %v1036, %v1038
  %v1042 = vsel %vm233, %v1038, %v1040
  %1045 = vst [vmem:[%s6 + $0x18] sm:$0xff] %v1041
  %1046 = vst [vmem:[%s6 + $0x20] sm:$0xff] %v1042
  %v1047 = vld [vmem:[%s5] sm:$0xff]
  %v1048 = vld [vmem:[%s5 + $0x8] sm:$0xff]
  %v1049 = vld [vmem:[%s5 + $0x10] sm:$0xff]
  %v1050 = vld [vmem:[%s5 + $0x18] sm:$0xff]
  %v1051 = vld [vmem:[%s5 + $0x20] sm:$0xff]
  %v1052 = vld [vmem:[%s5 + $0x28] sm:$0xff]
  %v1053 = vld [vmem:[%s5 + $0x30] sm:$0xff]
  %v1054 = vld [vmem:[%s5 + $0x38] sm:$0xff]
  %v1055 = vld [vmem:[%s5 + $0x40] sm:$0xff]
  %v1056 = vld [vmem:[%s5 + $0x48] sm:$0xff]
  %v1057 = vld [vmem:[%s5 + $0x50] sm:$0xff]
  %v1058 = vld [vmem:[%s5 + $0x58] sm:$0xff]
  %v1059 = vld [vmem:[%s5 + $0x60] sm:$0xff]
  %v1060 = vld [vmem:[%s5 + $0x68] sm:$0xff]
  %v1061 = vld [vmem:[%s5 + $0x70] sm:$0xff]
  %v1062 = vld [vmem:[%s5 + $0x78] sm:$0xff]
  %v1063 = vld [vmem:[%s5 + $0x80] sm:$0xff]
  %v1064 = vld [vmem:[%s5 + $0x88] sm:$0xff]
  %v1065 = vld [vmem:[%s5 + $0x90] sm:$0xff]
  %v1066 = vld [vmem:[%s5 + $0x98] sm:$0xff]
  %v1067 = vld [vmem:[%s5 + $0xa0] sm:$0xff]
  %v1068 = vld [vmem:[%s5 + $0xa8] sm:$0xff]
  %v1069 = vld [vmem:[%s5 + $0xb0] sm:$0xff]
  %v1070 = vld [vmem:[%s5 + $0xb8] sm:$0xff]
  %v1071 = vld [vmem:[%s5 + $0xc0] sm:$0xff]
  %v1072 = vld [vmem:[%s5 + $0xc8] sm:$0xff]
  %v1073 = vld [vmem:[%s5 + $0xd0] sm:$0xff]
  %v1074 = vld [vmem:[%s5 + $0xd8] sm:$0xff]
  %v1075 = vld [vmem:[%s5 + $0xe0] sm:$0xff]
  %v1076 = vld [vmem:[%s5 + $0xe8] sm:$0xff]
  %v1077 = vld [vmem:[%s5 + $0xf0] sm:$0xff]
  %v1078 = vld [vmem:[%s5 + $0xf8] sm:$0xff]
  %1079 = vmatprep.subr.mxu0 0.0
  %1080 = vmatpush1.msra.mxu0 %v1047
  %1081 = vmatprep.subr.mxu0 0.0
  %1082 = vmatpush1.msra.mxu0 %v1048
  %1083 = vmatprep.subr.mxu0 0.0
  %1084 = vmatpush1.msra.mxu0 %v1049
  %1085 = vmatprep.subr.mxu0 0.0
  %1086 = vmatpush1.msra.mxu0 %v1050
  %1087 = vmatprep.subr.mxu0 0.0
  %1088 = vmatpush1.msra.mxu0 %v1051
  %1089 = vmatprep.subr.mxu0 0.0
  %1090 = vmatpush1.msra.mxu0 %v1052
  %1091 = vmatprep.subr.mxu0 0.0
  %1092 = vmatpush1.msra.mxu0 %v1053
  %1093 = vmatprep.subr.mxu0 0.0
  %1094 = vmatpush1.msra.mxu0 %v1054
  %1095 = vmatprep.subr.mxu0 0.0
  %1096 = vmatpush1.msra.mxu0 %v1055
  %1097 = vmatprep.subr.mxu0 0.0
  %1098 = vmatpush1.msra.mxu0 %v1056
  %1099 = vmatprep.subr.mxu0 0.0
  %1100 = vmatpush1.msra.mxu0 %v1057
  %1101 = vmatprep.subr.mxu0 0.0
  %1102 = vmatpush1.msra.mxu0 %v1058
  %1103 = vmatprep.subr.mxu0 0.0
  %1104 = vmatpush1.msra.mxu0 %v1059
  %1105 = vmatprep.subr.mxu0 0.0
  %1106 = vmatpush1.msra.mxu0 %v1060
  %1107 = vmatprep.subr.mxu0 0.0
  %1108 = vmatpush1.msra.mxu0 %v1061
  %1109 = vmatprep.subr.mxu0 0.0
  %1110 = vmatpush1.msra.mxu0 %v1062
  %1111 = vmatprep.subr.mxu0 0.0
  %1112 = vmatpush1.msra.mxu0 %v1063
  %1113 = vmatprep.subr.mxu0 0.0
  %1114 = vmatpush1.msra.mxu0 %v1064
  %1115 = vmatprep.subr.mxu0 0.0
  %1116 = vmatpush1.msra.mxu0 %v1065
  %1117 = vmatprep.subr.mxu0 0.0
  %1118 = vmatpush1.msra.mxu0 %v1066
  %1119 = vmatprep.subr.mxu0 0.0
  %1120 = vmatpush1.msra.mxu0 %v1067
  %1121 = vmatprep.subr.mxu0 0.0
  %1122 = vmatpush1.msra.mxu0 %v1068
  %1123 = vmatprep.subr.mxu0 0.0
  %1124 = vmatpush1.msra.mxu0 %v1069
  %1125 = vmatprep.subr.mxu0 0.0
  %1126 = vmatpush1.msra.mxu0 %v1070
  %1127 = vmatprep.subr.mxu0 0.0
  %1128 = vmatpush1.msra.mxu0 %v1071
  %1129 = vmatprep.subr.mxu0 0.0
  %1130 = vmatpush1.msra.mxu0 %v1072
  %1131 = vmatprep.subr.mxu0 0.0
  %1132 = vmatpush1.msra.mxu0 %v1073
  %1133 = vmatprep.subr.mxu0 0.0
  %1134 = vmatpush1.msra.mxu0 %v1074
  %1135 = vmatprep.subr.mxu0 0.0
  %1136 = vmatpush1.msra.mxu0 %v1075
  %1137 = vmatprep.subr.mxu0 0.0
  %1138 = vmatpush1.msra.mxu0 %v1076
  %1139 = vmatprep.subr.mxu0 0.0
  %1140 = vmatpush1.msra.mxu0 %v1077
  %1141 = vmatprep.subr.mxu0 0.0
  %1142 = vmatpush1.msra.mxu0 %v1078
  %1143 = vmatprep.mubr.f32.mxu0 %v1042
  %1144 = vmatmul.mubr.f32.gmra.mrb[0].mxu0 %v1041
  %v1145 = vpop.f32.mrb[0].mxu0
  %v1146 = vadd.f32 0.0, %v1145
  %v1147 = vpop.f32.mrb[0].mxu0
  %1148 = vdwg.mxu0
  %vm1149 = vcmp.gt.f32.partialorder %v24, 0.0
  %1151 = vrot.lane.b32.xlu0 %v1146, 96
  %v1152 = vpop.permute.xlu0 %1151
  %v1154 = vsel %vm1149, %v1152, -1e+30
  %v1155 = vsel %vm493, %v1154, -inf
  %v1156 = vrot.slane %v1155, 4
  %v1157 = vmax.f32 %v1155, %v1156
  %v1158 = vrot.slane %v1157, 2
  %v1159 = vmax.f32 %v1157, %v1158
  %v1160 = vrot.slane %v1159, 1
  %v1161 = vmax.f32 %v1159, %v1160
  %v1162 = vsub.f32 %v1154, %v1161
  %v1163 = vmul.f32 %v1162, 1.442695
  %v1164 = vpow.pop %v1163
  %v1165 = vmul.f32 %v1164, %v24
  %v1166 = vsel %vm493, %v1165, 0.0
  %v1167 = vrot.slane %v1166, 4
  %v1168 = vadd.f32 %v1166, %v1167
  %v1169 = vrot.slane %v1168, 2
  %v1170 = vadd.f32 %v1168, %v1169
  %v1171 = vrot.slane %v1170, 1
  %v1172 = vadd.f32 %v1170, %v1171
  %v1173 = vmax.f32 %v1172, 1e-20
  %v1174 = vrcp.pop %v1173
  %v1175 = vmul.f32 %v1165, %v1174
  %1177 = vrot.lane.b32.xlu0 %v1175, 32
  %v1178 = vpop.permute.xlu0 %1177
  %1180 = vxpose.xlu0.b32.start [1/16] %v1178, 128
  %1181 = vxpose.xlu0.b32.cont [2/16] 0.0, 128
  %1182 = vxpose.xlu0.b32.cont [3/16] 0.0, 128
  %1183 = vxpose.xlu0.b32.cont [4/16] 0.0, 128
  %1184 = vxpose.xlu0.b32.cont [5/16] 0.0, 128
  %1185 = vxpose.xlu0.b32.cont [6/16] 0.0, 128
  %1186 = vxpose.xlu0.b32.cont [7/16] 0.0, 128
  %1187 = vxpose.xlu0.b32.cont [8/16] 0.0, 128
  %1188 = vxpose.xlu0.b32.cont [9/16] 0.0, 128
  %1189 = vxpose.xlu0.b32.cont [10/16] 0.0, 128
  %1190 = vxpose.xlu0.b32.cont [11/16] 0.0, 128
  %1191 = vxpose.xlu0.b32.cont [12/16] 0.0, 128
  %1192 = vxpose.xlu0.b32.cont [13/16] 0.0, 128
  %1193 = vxpose.xlu0.b32.cont [14/16] 0.0, 128
  %1194 = vxpose.xlu0.b32.cont [15/16] 0.0, 128
  %1195 = vxpose.xlu0.b32.end [16/16] 0.0, 128
  %v1196 = vpop.trf.xlu0
  %v1197 = vpop.trf.xlu0
  %v1198 = vpop.trf.xlu0
  %v1199 = vpop.trf.xlu0
  %v1200 = vpop.trf.xlu0
  %v1201 = vpop.trf.xlu0
  %v1202 = vpop.trf.xlu0
  %v1203 = vpop.trf.xlu0
  %v1204 = vpop.trf.xlu0
  %v1205 = vpop.trf.xlu0
  %v1206 = vpop.trf.xlu0
  %v1207 = vpop.trf.xlu0
  %v1208 = vpop.trf.xlu0
  %v1209 = vpop.trf.xlu0
  %v1210 = vpop.trf.xlu0
  %v1211 = vpop.trf.xlu0
  %v1213 = vsel %vm551, %v1196, 0
  %1215 = vmatprep.subr.mxu0 0.0
  %1216 = vmatpush1.msra.mxu0 %v134
  %1217 = vmatprep.subr.mxu0 0.0
  %1218 = vmatpush1.msra.mxu0 0.0
  %1219 = vmatprep.subr.mxu0 0.0
  %1220 = vmatpush1.msra.mxu0 0.0
  %1221 = vmatprep.subr.mxu0 0.0
  %1222 = vmatpush1.msra.mxu0 0.0
  %1223 = vmatprep.subr.mxu0 0.0
  %1224 = vmatpush1.msra.mxu0 0.0
  %1225 = vmatprep.subr.mxu0 0.0
  %1226 = vmatpush1.msra.mxu0 0.0
  %1227 = vmatprep.subr.mxu0 0.0
  %1228 = vmatpush1.msra.mxu0 0.0
  %1229 = vmatprep.subr.mxu0 0.0
  %1230 = vmatpush1.msra.mxu0 0.0
  %1231 = vmatprep.subr.mxu0 0.0
  %1232 = vmatpush1.msra.mxu0 0.0
  %1233 = vmatprep.subr.mxu0 0.0
  %1234 = vmatpush1.msra.mxu0 0.0
  %1235 = vmatprep.subr.mxu0 0.0
  %1236 = vmatpush1.msra.mxu0 0.0
  %1237 = vmatprep.subr.mxu0 0.0
  %1238 = vmatpush1.msra.mxu0 0.0
  %1239 = vmatprep.subr.mxu0 0.0
  %1240 = vmatpush1.msra.mxu0 0.0
  %1241 = vmatprep.subr.mxu0 0.0
  %1242 = vmatpush1.msra.mxu0 0.0
  %1243 = vmatprep.subr.mxu0 0.0
  %1244 = vmatpush1.msra.mxu0 0.0
  %1245 = vmatprep.subr.mxu0 0.0
  %1246 = vmatpush1.msra.mxu0 0.0
  %1247 = vmatprep.subr.mxu0 0.0
  %1248 = vmatpush1.msra.mxu0 0.0
  %1249 = vmatprep.subr.mxu0 0.0
  %1250 = vmatpush1.msra.mxu0 0.0
  %1251 = vmatprep.subr.mxu0 0.0
  %1252 = vmatpush1.msra.mxu0 0.0
  %1253 = vmatprep.subr.mxu0 0.0
  %1254 = vmatpush1.msra.mxu0 0.0
  %1255 = vmatprep.subr.mxu0 0.0
  %1256 = vmatpush1.msra.mxu0 0.0
  %1257 = vmatprep.subr.mxu0 0.0
  %1258 = vmatpush1.msra.mxu0 0.0
  %1259 = vmatprep.subr.mxu0 0.0
  %1260 = vmatpush1.msra.mxu0 0.0
  %1261 = vmatprep.subr.mxu0 0.0
  %1262 = vmatpush1.msra.mxu0 0.0
  %1263 = vmatprep.subr.mxu0 0.0
  %1264 = vmatpush1.msra.mxu0 0.0
  %1265 = vmatprep.subr.mxu0 0.0
  %1266 = vmatpush1.msra.mxu0 0.0
  %1267 = vmatprep.subr.mxu0 0.0
  %1268 = vmatpush1.msra.mxu0 0.0
  %1269 = vmatprep.subr.mxu0 0.0
  %1270 = vmatpush1.msra.mxu0 0.0
  %1271 = vmatprep.subr.mxu0 0.0
  %1272 = vmatpush1.msra.mxu0 0.0
  %1273 = vmatprep.subr.mxu0 0.0
  %1274 = vmatpush1.msra.mxu0 0.0
  %1275 = vmatprep.subr.mxu0 0.0
  %1276 = vmatpush1.msra.mxu0 0.0
  %1277 = vmatprep.subr.mxu0 0.0
  %1278 = vmatpush1.msra.mxu0 0.0
  %1279 = vmatprep.mubr.f32.mxu0 0.0
  %1280 = vmatmul.mubr.f32.gmra.mrb[0].mxu0 %v1213
  %v1281 = vpop.f32.mrb[0].mxu0
  %v1282 = vadd.f32 0.0, %v1281
  %v1283 = vpop.f32.mrb[0].mxu0
  %1284 = vdwg.mxu0
  %1285 = vst.msk [vmem:[%s6 + $0x28] sm:$0xff] %vm625, %v1282
  %1286 = vrot.lane.b32.xlu0 %v1175, 24
  %v1287 = vpop.permute.xlu0 %1286
  %1289 = vxpose.xlu0.b32.start [1/16] %v1287, 128
  %1290 = vxpose.xlu0.b32.cont [2/16] 0.0, 128
  %1291 = vxpose.xlu0.b32.cont [3/16] 0.0, 128
  %1292 = vxpose.xlu0.b32.cont [4/16] 0.0, 128
  %1293 = vxpose.xlu0.b32.cont [5/16] 0.0, 128
  %1294 = vxpose.xlu0.b32.cont [6/16] 0.0, 128
  %1295 = vxpose.xlu0.b32.cont [7/16] 0.0, 128
  %1296 = vxpose.xlu0.b32.cont [8/16] 0.0, 128
  %1297 = vxpose.xlu0.b32.cont [9/16] 0.0, 128
  %1298 = vxpose.xlu0.b32.cont [10/16] 0.0, 128
  %1299 = vxpose.xlu0.b32.cont [11/16] 0.0, 128
  %1300 = vxpose.xlu0.b32.cont [12/16] 0.0, 128
  %1301 = vxpose.xlu0.b32.cont [13/16] 0.0, 128
  %1302 = vxpose.xlu0.b32.cont [14/16] 0.0, 128
  %1303 = vxpose.xlu0.b32.cont [15/16] 0.0, 128
  %1304 = vxpose.xlu0.b32.end [16/16] 0.0, 128
  %v1305 = vpop.trf.xlu0
  %v1306 = vpop.trf.xlu0
  %v1307 = vpop.trf.xlu0
  %v1308 = vpop.trf.xlu0
  %v1309 = vpop.trf.xlu0
  %v1310 = vpop.trf.xlu0
  %v1311 = vpop.trf.xlu0
  %v1312 = vpop.trf.xlu0
  %v1313 = vpop.trf.xlu0
  %v1314 = vpop.trf.xlu0
  %v1315 = vpop.trf.xlu0
  %v1316 = vpop.trf.xlu0
  %v1317 = vpop.trf.xlu0
  %v1318 = vpop.trf.xlu0
  %v1319 = vpop.trf.xlu0
  %v1320 = vpop.trf.xlu0
  %1322 = vrot.lane.b32.xlu0 %v134, 112
  %v1323 = vpop.permute.xlu0 %1322
  %v1326 = vsel %vm551, %v1305, 0
  %1328 = vmatprep.subr.mxu0 0.0
  %1329 = vmatpush1.msra.mxu0 %v1323
  %1330 = vmatprep.subr.mxu0 0.0
  %1331 = vmatpush1.msra.mxu0 0.0
  %1332 = vmatprep.subr.mxu0 0.0
  %1333 = vmatpush1.msra.mxu0 0.0
  %1334 = vmatprep.subr.mxu0 0.0
  %1335 = vmatpush1.msra.mxu0 0.0
  %1336 = vmatprep.subr.mxu0 0.0
  %1337 = vmatpush1.msra.mxu0 0.0
  %1338 = vmatprep.subr.mxu0 0.0
  %1339 = vmatpush1.msra.mxu0 0.0
  %1340 = vmatprep.subr.mxu0 0.0
  %1341 = vmatpush1.msra.mxu0 0.0
  %1342 = vmatprep.subr.mxu0 0.0
  %1343 = vmatpush1.msra.mxu0 0.0
  %1344 = vmatprep.subr.mxu0 0.0
  %1345 = vmatpush1.msra.mxu0 0.0
  %1346 = vmatprep.subr.mxu0 0.0
  %1347 = vmatpush1.msra.mxu0 0.0
  %1348 = vmatprep.subr.mxu0 0.0
  %1349 = vmatpush1.msra.mxu0 0.0
  %1350 = vmatprep.subr.mxu0 0.0
  %1351 = vmatpush1.msra.mxu0 0.0
  %1352 = vmatprep.subr.mxu0 0.0
  %1353 = vmatpush1.msra.mxu0 0.0
  %1354 = vmatprep.subr.mxu0 0.0
  %1355 = vmatpush1.msra.mxu0 0.0
  %1356 = vmatprep.subr.mxu0 0.0
  %1357 = vmatpush1.msra.mxu0 0.0
  %1358 = vmatprep.subr.mxu0 0.0
  %1359 = vmatpush1.msra.mxu0 0.0
  %1360 = vmatprep.subr.mxu0 0.0
  %1361 = vmatpush1.msra.mxu0 0.0
  %1362 = vmatprep.subr.mxu0 0.0
  %1363 = vmatpush1.msra.mxu0 0.0
  %1364 = vmatprep.subr.mxu0 0.0
  %1365 = vmatpush1.msra.mxu0 0.0
  %1366 = vmatprep.subr.mxu0 0.0
  %1367 = vmatpush1.msra.mxu0 0.0
  %1368 = vmatprep.subr.mxu0 0.0
  %1369 = vmatpush1.msra.mxu0 0.0
  %1370 = vmatprep.subr.mxu0 0.0
  %1371 = vmatpush1.msra.mxu0 0.0
  %1372 = vmatprep.subr.mxu0 0.0
  %1373 = vmatpush1.msra.mxu0 0.0
  %1374 = vmatprep.subr.mxu0 0.0
  %1375 = vmatpush1.msra.mxu0 0.0
  %1376 = vmatprep.subr.mxu0 0.0
  %1377 = vmatpush1.msra.mxu0 0.0
  %1378 = vmatprep.subr.mxu0 0.0
  %1379 = vmatpush1.msra.mxu0 0.0
  %1380 = vmatprep.subr.mxu0 0.0
  %1381 = vmatpush1.msra.mxu0 0.0
  %1382 = vmatprep.subr.mxu0 0.0
  %1383 = vmatpush1.msra.mxu0 0.0
  %1384 = vmatprep.subr.mxu0 0.0
  %1385 = vmatpush1.msra.mxu0 0.0
  %1386 = vmatprep.subr.mxu0 0.0
  %1387 = vmatpush1.msra.mxu0 0.0
  %1388 = vmatprep.subr.mxu0 0.0
  %1389 = vmatpush1.msra.mxu0 0.0
  %1390 = vmatprep.subr.mxu0 0.0
  %1391 = vmatpush1.msra.mxu0 0.0
  %1392 = vmatprep.mubr.f32.mxu0 0.0
  %1393 = vmatmul.mubr.f32.gmra.mrb[0].mxu0 %v1326
  %v1394 = vpop.f32.mrb[0].mxu0
  %v1395 = vadd.f32 0.0, %v1394
  %v1396 = vpop.f32.mrb[0].mxu0
  %1397 = vdwg.mxu0
  %1399 = vrot.lane.b32.xlu0 %v1395, 16
  %v1400 = vpop.permute.xlu0 %1399
  %1402 = vst.msk [vmem:[%s6 + $0x28] sm:$0xff] %vm743, %v1400
  %1403 = vrot.lane.b32.xlu0 %v1175, 16
  %v1404 = vpop.permute.xlu0 %1403
  %1406 = vxpose.xlu0.b32.start [1/16] %v1404, 128
  %1407 = vxpose.xlu0.b32.cont [2/16] 0.0, 128
  %1408 = vxpose.xlu0.b32.cont [3/16] 0.0, 128
  %1409 = vxpose.xlu0.b32.cont [4/16] 0.0, 128
  %1410 = vxpose.xlu0.b32.cont [5/16] 0.0, 128
  %1411 = vxpose.xlu0.b32.cont [6/16] 0.0, 128
  %1412 = vxpose.xlu0.b32.cont [7/16] 0.0, 128
  %1413 = vxpose.xlu0.b32.cont [8/16] 0.0, 128
  %1414 = vxpose.xlu0.b32.cont [9/16] 0.0, 128
  %1415 = vxpose.xlu0.b32.cont [10/16] 0.0, 128
  %1416 = vxpose.xlu0.b32.cont [11/16] 0.0, 128
  %1417 = vxpose.xlu0.b32.cont [12/16] 0.0, 128
  %1418 = vxpose.xlu0.b32.cont [13/16] 0.0, 128
  %1419 = vxpose.xlu0.b32.cont [14/16] 0.0, 128
  %1420 = vxpose.xlu0.b32.cont [15/16] 0.0, 128
  %1421 = vxpose.xlu0.b32.end [16/16] 0.0, 128
  %v1422 = vpop.trf.xlu0
  %v1423 = vpop.trf.xlu0
  %v1424 = vpop.trf.xlu0
  %v1425 = vpop.trf.xlu0
  %v1426 = vpop.trf.xlu0
  %v1427 = vpop.trf.xlu0
  %v1428 = vpop.trf.xlu0
  %v1429 = vpop.trf.xlu0
  %v1430 = vpop.trf.xlu0
  %v1431 = vpop.trf.xlu0
  %v1432 = vpop.trf.xlu0
  %v1433 = vpop.trf.xlu0
  %v1434 = vpop.trf.xlu0
  %v1435 = vpop.trf.xlu0
  %v1436 = vpop.trf.xlu0
  %v1437 = vpop.trf.xlu0
  %1438 = vrot.lane.b32.xlu0 %v134, 96
  %v1439 = vpop.permute.xlu0 %1438
  %v1442 = vsel %vm551, %v1422, 0
  %1444 = vmatprep.subr.mxu0 0.0
  %1445 = vmatpush1.msra.mxu0 %v1439
  %1446 = vmatprep.subr.mxu0 0.0
  %1447 = vmatpush1.msra.mxu0 0.0
  %1448 = vmatprep.subr.mxu0 0.0
  %1449 = vmatpush1.msra.mxu0 0.0
  %1450 = vmatprep.subr.mxu0 0.0
  %1451 = vmatpush1.msra.mxu0 0.0
  %1452 = vmatprep.subr.mxu0 0.0
  %1453 = vmatpush1.msra.mxu0 0.0
  %1454 = vmatprep.subr.mxu0 0.0
  %1455 = vmatpush1.msra.mxu0 0.0
  %1456 = vmatprep.subr.mxu0 0.0
  %1457 = vmatpush1.msra.mxu0 0.0
  %1458 = vmatprep.subr.mxu0 0.0
  %1459 = vmatpush1.msra.mxu0 0.0
  %1460 = vmatprep.subr.mxu0 0.0
  %1461 = vmatpush1.msra.mxu0 0.0
  %1462 = vmatprep.subr.mxu0 0.0
  %1463 = vmatpush1.msra.mxu0 0.0
  %1464 = vmatprep.subr.mxu0 0.0
  %1465 = vmatpush1.msra.mxu0 0.0
  %1466 = vmatprep.subr.mxu0 0.0
  %1467 = vmatpush1.msra.mxu0 0.0
  %1468 = vmatprep.subr.mxu0 0.0
  %1469 = vmatpush1.msra.mxu0 0.0
  %1470 = vmatprep.subr.mxu0 0.0
  %1471 = vmatpush1.msra.mxu0 0.0
  %1472 = vmatprep.subr.mxu0 0.0
  %1473 = vmatpush1.msra.mxu0 0.0
  %1474 = vmatprep.subr.mxu0 0.0
  %1475 = vmatpush1.msra.mxu0 0.0
  %1476 = vmatprep.subr.mxu0 0.0
  %1477 = vmatpush1.msra.mxu0 0.0
  %1478 = vmatprep.subr.mxu0 0.0
  %1479 = vmatpush1.msra.mxu0 0.0
  %1480 = vmatprep.subr.mxu0 0.0
  %1481 = vmatpush1.msra.mxu0 0.0
  %1482 = vmatprep.subr.mxu0 0.0
  %1483 = vmatpush1.msra.mxu0 0.0
  %1484 = vmatprep.subr.mxu0 0.0
  %1485 = vmatpush1.msra.mxu0 0.0
  %1486 = vmatprep.subr.mxu0 0.0
  %1487 = vmatpush1.msra.mxu0 0.0
  %1488 = vmatprep.subr.mxu0 0.0
  %1489 = vmatpush1.msra.mxu0 0.0
  %1490 = vmatprep.subr.mxu0 0.0
  %1491 = vmatpush1.msra.mxu0 0.0
  %1492 = vmatprep.subr.mxu0 0.0
  %1493 = vmatpush1.msra.mxu0 0.0
  %1494 = vmatprep.subr.mxu0 0.0
  %1495 = vmatpush1.msra.mxu0 0.0
  %1496 = vmatprep.subr.mxu0 0.0
  %1497 = vmatpush1.msra.mxu0 0.0
  %1498 = vmatprep.subr.mxu0 0.0
  %1499 = vmatpush1.msra.mxu0 0.0
  %1500 = vmatprep.subr.mxu0 0.0
  %1501 = vmatpush1.msra.mxu0 0.0
  %1502 = vmatprep.subr.mxu0 0.0
  %1503 = vmatpush1.msra.mxu0 0.0
  %1504 = vmatprep.subr.mxu0 0.0
  %1505 = vmatpush1.msra.mxu0 0.0
  %1506 = vmatprep.subr.mxu0 0.0
  %1507 = vmatpush1.msra.mxu0 0.0
  %1508 = vmatprep.mubr.f32.mxu0 0.0
  %1509 = vmatmul.mubr.f32.gmra.mrb[0].mxu0 %v1442
  %v1510 = vpop.f32.mrb[0].mxu0
  %v1511 = vadd.f32 0.0, %v1510
  %v1512 = vpop.f32.mrb[0].mxu0
  %1513 = vdwg.mxu0
  %1515 = vrot.lane.b32.xlu0 %v1511, 32
  %v1516 = vpop.permute.xlu0 %1515
  %1518 = vst.msk [vmem:[%s6 + $0x28] sm:$0xff] %vm860, %v1516
  %1519 = vrot.lane.b32.xlu0 %v1175, 8
  %v1520 = vpop.permute.xlu0 %1519
  %1522 = vxpose.xlu0.b32.start [1/16] %v1520, 128
  %1523 = vxpose.xlu0.b32.cont [2/16] 0.0, 128
  %1524 = vxpose.xlu0.b32.cont [3/16] 0.0, 128
  %1525 = vxpose.xlu0.b32.cont [4/16] 0.0, 128
  %1526 = vxpose.xlu0.b32.cont [5/16] 0.0, 128
  %1527 = vxpose.xlu0.b32.cont [6/16] 0.0, 128
  %1528 = vxpose.xlu0.b32.cont [7/16] 0.0, 128
  %1529 = vxpose.xlu0.b32.cont [8/16] 0.0, 128
  %1530 = vxpose.xlu0.b32.cont [9/16] 0.0, 128
  %1531 = vxpose.xlu0.b32.cont [10/16] 0.0, 128
  %1532 = vxpose.xlu0.b32.cont [11/16] 0.0, 128
  %1533 = vxpose.xlu0.b32.cont [12/16] 0.0, 128
  %1534 = vxpose.xlu0.b32.cont [13/16] 0.0, 128
  %1535 = vxpose.xlu0.b32.cont [14/16] 0.0, 128
  %1536 = vxpose.xlu0.b32.cont [15/16] 0.0, 128
  %1537 = vxpose.xlu0.b32.end [16/16] 0.0, 128
  %v1538 = vpop.trf.xlu0
  %v1539 = vpop.trf.xlu0
  %v1540 = vpop.trf.xlu0
  %v1541 = vpop.trf.xlu0
  %v1542 = vpop.trf.xlu0
  %v1543 = vpop.trf.xlu0
  %v1544 = vpop.trf.xlu0
  %v1545 = vpop.trf.xlu0
  %v1546 = vpop.trf.xlu0
  %v1547 = vpop.trf.xlu0
  %v1548 = vpop.trf.xlu0
  %v1549 = vpop.trf.xlu0
  %v1550 = vpop.trf.xlu0
  %v1551 = vpop.trf.xlu0
  %v1552 = vpop.trf.xlu0
  %v1553 = vpop.trf.xlu0
  %1554 = vrot.lane.b32.xlu0 %v134, 80
  %v1555 = vpop.permute.xlu0 %1554
  %v1558 = vsel %vm551, %v1538, 0
  %1560 = vmatprep.subr.mxu0 0.0
  %1561 = vmatpush1.msra.mxu0 %v1555
  %1562 = vmatprep.subr.mxu0 0.0
  %1563 = vmatpush1.msra.mxu0 0.0
  %1564 = vmatprep.subr.mxu0 0.0
  %1565 = vmatpush1.msra.mxu0 0.0
  %1566 = vmatprep.subr.mxu0 0.0
  %1567 = vmatpush1.msra.mxu0 0.0
  %1568 = vmatprep.subr.mxu0 0.0
  %1569 = vmatpush1.msra.mxu0 0.0
  %1570 = vmatprep.subr.mxu0 0.0
  %1571 = vmatpush1.msra.mxu0 0.0
  %1572 = vmatprep.subr.mxu0 0.0
  %1573 = vmatpush1.msra.mxu0 0.0
  %1574 = vmatprep.subr.mxu0 0.0
  %1575 = vmatpush1.msra.mxu0 0.0
  %1576 = vmatprep.subr.mxu0 0.0
  %1577 = vmatpush1.msra.mxu0 0.0
  %1578 = vmatprep.subr.mxu0 0.0
  %1579 = vmatpush1.msra.mxu0 0.0
  %1580 = vmatprep.subr.mxu0 0.0
  %1581 = vmatpush1.msra.mxu0 0.0
  %1582 = vmatprep.subr.mxu0 0.0
  %1583 = vmatpush1.msra.mxu0 0.0
  %1584 = vmatprep.subr.mxu0 0.0
  %1585 = vmatpush1.msra.mxu0 0.0
  %1586 = vmatprep.subr.mxu0 0.0
  %1587 = vmatpush1.msra.mxu0 0.0
  %1588 = vmatprep.subr.mxu0 0.0
  %1589 = vmatpush1.msra.mxu0 0.0
  %1590 = vmatprep.subr.mxu0 0.0
  %1591 = vmatpush1.msra.mxu0 0.0
  %1592 = vmatprep.subr.mxu0 0.0
  %1593 = vmatpush1.msra.mxu0 0.0
  %1594 = vmatprep.subr.mxu0 0.0
  %1595 = vmatpush1.msra.mxu0 0.0
  %1596 = vmatprep.subr.mxu0 0.0
  %1597 = vmatpush1.msra.mxu0 0.0
  %1598 = vmatprep.subr.mxu0 0.0
  %1599 = vmatpush1.msra.mxu0 0.0
  %1600 = vmatprep.subr.mxu0 0.0
  %1601 = vmatpush1.msra.mxu0 0.0
  %1602 = vmatprep.subr.mxu0 0.0
  %1603 = vmatpush1.msra.mxu0 0.0
  %1604 = vmatprep.subr.mxu0 0.0
  %1605 = vmatpush1.msra.mxu0 0.0
  %1606 = vmatprep.subr.mxu0 0.0
  %1607 = vmatpush1.msra.mxu0 0.0
  %1608 = vmatprep.subr.mxu0 0.0
  %1609 = vmatpush1.msra.mxu0 0.0
  %1610 = vmatprep.subr.mxu0 0.0
  %1611 = vmatpush1.msra.mxu0 0.0
  %1612 = vmatprep.subr.mxu0 0.0
  %1613 = vmatpush1.msra.mxu0 0.0
  %1614 = vmatprep.subr.mxu0 0.0
  %1615 = vmatpush1.msra.mxu0 0.0
  %1616 = vmatprep.subr.mxu0 0.0
  %1617 = vmatpush1.msra.mxu0 0.0
  %1618 = vmatprep.subr.mxu0 0.0
  %1619 = vmatpush1.msra.mxu0 0.0
  %1620 = vmatprep.subr.mxu0 0.0
  %1621 = vmatpush1.msra.mxu0 0.0
  %1622 = vmatprep.subr.mxu0 0.0
  %1623 = vmatpush1.msra.mxu0 0.0
  %1624 = vmatprep.mubr.f32.mxu0 0.0
  %1625 = vmatmul.mubr.f32.gmra.mrb[0].mxu0 %v1558
  %v1626 = vpop.f32.mrb[0].mxu0
  %v1627 = vadd.f32 0.0, %v1626
  %v1628 = vpop.f32.mrb[0].mxu0
  %1629 = vdwg.mxu0
  %1631 = vrot.lane.b32.xlu0 %v1627, 48
  %v1632 = vpop.permute.xlu0 %1631
  %1634 = vst.msk [vmem:[%s6 + $0x28] sm:$0xff] %vm977, %v1632
  // Predicated region
  $region26: #{egat_forward.1} parent=0 // pred_check
    _
  $region27: #{egat_forward.1} parent=0 // pred_check_branch
    %1636 = sbr.rel (0) target = $region29
  $region28: #{egat_forward.1} parent=0 // pred_region
    _
  $region29: #{egat_forward.1} parent=0 // pred_fallthru
    _
  // Predicated region
  $region30: #{egat_forward.1} parent=0 // pred_check
    _
  $region31: #{egat_forward.1} parent=0 // pred_check_branch
    %1638 = sbr.rel (0) target = $region33
  $region32: #{egat_forward.1} parent=0 // pred_region
    _
  $region33: #{egat_forward.1} parent=0 // pred_fallthru
    _

</llo_original>
